<compile_context>
chip_gen: v6e
topology: v6e:2x2x1
jax: 0.10.0
libtpu: 0.0.40
codegen_flags: <defaults>
</compile_context>

<pallas_src>
import functools
import math

import jax
import jax.numpy as jnp
import numpy as np
from jax.experimental import pallas as pl
from jax.experimental.pallas import tpu as pltpu

_LN_EPS = 1e-5


# ----------------------------------------------------------------------------
# Helpers (trace-time only)
# ----------------------------------------------------------------------------
def _vmem_budget_bytes():
    """~3/4 of per-core VMEM, capped at 96 MiB (v5e/v6e ~96 MiB, v7x ~48 MiB)."""
    try:
        cap = pltpu.get_tpu_info().vmem_capacity_bytes
    except Exception:
        cap = 64 * 1024 * 1024          # conservative fallback (v7x-sized)
    return int(min(cap * 3 // 4, 96 * 1024 * 1024))


def _divisors(n):
    return [d for d in range(1, n + 1) if n % d == 0]


def _pick_ln_block(B, C, HW, budget):
    """Pick (batch_fold, spatial_tile) so one LN block is ~0.5-2 MiB."""
    target = max(512 * 1024, min(budget // 8, 2 * 1024 * 1024))
    per_batch = C * HW * 4
    if per_batch <= target:
        nb = 1
        for d in _divisors(B):
            if d * per_batch <= target:
                nb = d
        return nb, HW
    cands = [d for d in _divisors(HW) if d % 128 == 0]
    ok = [d for d in cands if C * d * 4 <= target]
    if ok:
        return 1, max(ok)
    if cands:
        return 1, min(cands)
    return 1, HW


def _line_pad_len(TH, W):
    """Left pad so the interior store is lane-aligned; total rounded to 128."""
    pad = ((W + 1 + 127) // 128) * 128 - W        # pad >= 1, (pad + W) % 128 == 0
    total = pad + (TH + 2) * W + 1                # +1 slack for the (+1,+1) tap
    total = ((total + 127) // 128) * 128
    return pad, total


def _pick_row_tile(H, W, C, Cmid, budget, row_tile):
    """Pick TH (image rows per grid step) for the fused conv-MLP kernel."""
    def ok(th):
        return H % th == 0 and th % 8 == 0 and ((th * W) % 128 == 0 or th == H)

    if H % 8 != 0:
        return H                                   # fallback: whole image per step
    if row_tile is not None and ok(row_tile):
        return row_tile
    cands = sorted([d for d in _divisors(H) if ok(d)], reverse=True)
    if not cands:
        return H

    def est(th):                                   # rough per-step VMEM estimate
        tw = th * W
        lb = _line_pad_len(th, W)[1]
        # 2x-buffered in/out blocks + line buffer + ~6 live (Cmid, tw) f32 temps
        return 4 * (4 * C * tw + Cmid * lb + 6 * Cmid * tw + 8 * C * 8 * W)

    for th in cands:
        if est(th) <= budget // 2:
            return th
    return cands[-1]


# ----------------------------------------------------------------------------
# In-kernel exact GELU (erf via Abramowitz & Stegun 7.1.26, |err| < 1.5e-7).
# The divide is routed through pl.reciprocal (EUP path); approx=False keeps
# full f32 parity with torch.nn.GELU() -- flip to True for extra VALU relief.
# ----------------------------------------------------------------------------
def _gelu_exact(x):
    z = x * 0.7071067811865476            # x / sqrt(2)
    a = jnp.abs(z)
    t = pl.reciprocal(1.0 + 0.3275911 * a, approx=False)
    poly = t * (0.254829592 + t * (-0.284496736 + t * (1.421413741 +
           t * (-1.453152027 + t * 1.061405429))))
    erf_abs = 1.0 - poly * jnp.exp(-a * a)
    erf = jnp.where(z < 0.0, -erf_abs, erf_abs)
    return 0.5 * x * (1.0 + erf)


# ----------------------------------------------------------------------------
# Kernel 1: LayerNorm over channels; output stored pre-transposed (ts, C) so
# the module's permute+reshape is a free reinterpretation of the HBM buffer.
#   x block : (NB, C, ts)   channels on sublanes, spatial on lanes
#   o block : (NB, ts, C)
# ----------------------------------------------------------------------------
def _layernorm_kernel(x_ref, gamma_ref, beta_ref, o_ref, *, eps):
    x = x_ref[...]                                        # (NB, C, TS) f32
    mu = jnp.mean(x, axis=1, keepdims=True)               # (NB, 1, TS)
    xc = x - mu
    var = jnp.mean(xc * xc, axis=1, keepdims=True)        # biased var (torch LN)
    y = xc * jax.lax.rsqrt(var + eps) * gamma_ref[...] + beta_ref[...]
    for n in range(x.shape[0]):                           # static unroll over NB
        o_ref[n] = y[n].T                                 # (TS, C) XLU transpose


# ----------------------------------------------------------------------------
# Kernel 2: fused 1x1 conv -> GELU -> depthwise 3x3 -> GELU -> 1x1 conv.
# One grid step = one batch element x TH image rows.
#   x_ref  : (1, C, TH*W)     channel-shuffled input rows for this tile
#   xp_ref : (1, C, Hh, W)    strip containing the image row just above the tile
#   xn_ref : (1, C, Hh, W)    strip containing the image row just below the tile
#   w1     : (Cmid, C)        first pointwise conv
#   w2     : (9, Cmid, 1)     depthwise 3x3 weights, tap-major
#   w3     : (C, Cmid)        last pointwise conv
#   masks  : (1, TH*W) f32    column-wrap masks for the fused spatial dim
#   o_ref  : (1, C, TH*W)
#   line_ref : (Cmid, LB)     zero-padded VMEM line buffer (scratch)
# ----------------------------------------------------------------------------
def _mlp_kernel(x_ref, xp_ref, xn_ref, w1_ref, w2_ref, w3_ref, mnf_ref, mnl_ref,
                o_ref, line_ref, *, TH, W, PAD, Hh):
    TW = TH * W
    r = pl.program_id(1)
    n_rt = pl.num_programs(1)
    cmid = line_ref.shape[0]
    LB = line_ref.shape[1]
    cdt = w1_ref.dtype

    w1 = w1_ref[...]

    # ---- 1x1 conv (channel expansion) on the MXU + exact GELU --------------
    x = x_ref[0].astype(cdt)                                        # (C, TW)
    g = _gelu_exact(jnp.dot(w1, x, preferred_element_type=jnp.float32))

    # ---- vertical halo rows, recomputed from the 8-row strips --------------
    xp = xp_ref[0][:, Hh - 1, :].astype(cdt)                        # (C, W)
    xn = xn_ref[0][:, 0, :].astype(cdt)                             # (C, W)
    g_top = _gelu_exact(jnp.dot(w1, xp, preferred_element_type=jnp.float32))
    g_bot = _gelu_exact(jnp.dot(w1, xn, preferred_element_type=jnp.float32))
    g_top = g_top * (r > 0).astype(jnp.float32)          # zero pad at image top
    g_bot = g_bot * (r < n_rt - 1).astype(jnp.float32)   # zero pad at image bottom

    # ---- zero-padded line buffer --------------------------------------------
    # layout: [slack PAD | top halo row (W) | interior TH*W | bottom halo row (W) | slack]
    # Only the two tiny slack strips are memset (the masked corner taps read one
    # element of each); everything else is overwritten every step, so the
    # full-buffer memset of the previous revision is gone (vst relief).
    line_ref[:, 0:PAD] = jnp.zeros((cmid, PAD), jnp.float32)
    line_ref[:, PAD:PAD + W] = g_top
    line_ref[:, PAD + W:PAD + W + TW] = g                 # lane-aligned store
    line_ref[:, PAD + W + TW:PAD + (TH + 2) * W] = g_bot
    tail = PAD + (TH + 2) * W
    line_ref[:, tail:] = jnp.zeros((cmid, LB - tail), jnp.float32)

    # ---- depthwise 3x3 (padding=1, groups=Cmid): 9 shifted static reads -----
    base = PAD + W

    def win(di, dj):
        s = base + di * W + dj                            # compile-time constant
        return line_ref[:, s:s + TW]

    w2 = w2_ref[...]                                      # (9, Cmid, 1)
    acc_c = w2[4] * g + w2[1] * win(-1, 0) + w2[7] * win(1, 0)
    acc_l = w2[0] * win(-1, -1) + w2[3] * win(0, -1) + w2[6] * win(1, -1)
    acc_r = w2[2] * win(-1, 1) + w2[5] * win(0, 1) + w2[8] * win(1, 1)
    # one precomputed 0/1 mask multiply per column-shift direction (no iota/%).
    conv = acc_c + acc_l * mnf_ref[...] + acc_r * mnl_ref[...]

    # ---- GELU + 1x1 conv (projection back to C channels) on the MXU ---------
    g2 = _gelu_exact(conv).astype(w3_ref.dtype)
    o_ref[0] = jnp.dot(w3_ref[...], g2,
                       preferred_element_type=jnp.float32).astype(o_ref.dtype)


# ----------------------------------------------------------------------------
# Wrapper
# ----------------------------------------------------------------------------
def _norm_mlp_impl(x, ln_gamma, ln_beta, conv1_w, dw_w, conv3_w, row_tile, mxu_dtype):
    B, C, H, W = x.shape
    HW = H * W
    Cmid = conv1_w.shape[0]
    budget = _vmem_budget_bytes()

    # -------- Kernel 1: LayerNorm over the channel dim, pre-transposed out --
    x_flat = x.reshape(B, C, HW).astype(jnp.float32)
    gamma = ln_gamma.reshape(1, C, 1).astype(jnp.float32)
    beta = ln_beta.reshape(1, C, 1).astype(jnp.float32)

    nb, ts = _pick_ln_block(B, C, HW, budget)
    z = pl.pallas_call(
        functools.partial(_layernorm_kernel, eps=_LN_EPS),
        out_shape=jax.ShapeDtypeStruct((B, HW, C), jnp.float32),
        grid_spec=pltpu.PrefetchScalarGridSpec(
            num_scalar_prefetch=0,
            grid=(B // nb, HW // ts),
            in_specs=[
                pl.BlockSpec((nb, C, ts), lambda b, s: (b, 0, s)),
                pl.BlockSpec((1, C, 1), lambda b, s: (0, 0, 0)),
                pl.BlockSpec((1, C, 1), lambda b, s: (0, 0, 0)),
            ],
            out_specs=pl.BlockSpec((nb, ts, C), lambda b, s: (b, s, 0)),
        ),
        compiler_params=pltpu.CompilerParams(
            dimension_semantics=("parallel", "parallel"),
            vmem_limit_bytes=budget),
    )(x_flat, gamma, beta)

    # permute(0,2,1) + reshape(B, C, H, W) of the module is now a *free*
    # row-major reinterpretation of z (no XLA transpose / extra HBM pass).
    x2 = z.reshape(B, C, HW)
    x4 = z.reshape(B, C, H, W)          # same buffer, 4-D view for halo strips

    # -------- Kernel 2: fused conv-MLP, row-tiled ----------------------------
    TH = _pick_row_tile(H, W, C, Cmid, budget, row_tile)
    n_rt = H // TH
    Hh = 8 if H % 8 == 0 else H         # halo strip height (H-blocks of this size)
    K = TH // Hh
    NHB = H // Hh
    PAD, LB = _line_pad_len(TH, W)
    TW = TH * W

    w1 = conv1_w.reshape(Cmid, C).astype(mxu_dtype)
    w3 = conv3_w.reshape(C, Cmid).astype(mxu_dtype)
    w2_taps = dw_w.reshape(Cmid, 9).T.reshape(9, Cmid, 1).astype(jnp.float32)

    col = np.arange(TW) % W             # trace-time constants, not per-step iota
    mask_nf = jnp.asarray((col != 0).astype(np.float32)).reshape(1, TW)
    mask_nl = jnp.asarray((col != W - 1).astype(np.float32)).reshape(1, TW)

    out = pl.pallas_call(
        functools.partial(_mlp_kernel, TH=TH, W=W, PAD=PAD, Hh=Hh),
        out_shape=jax.ShapeDtypeStruct((B, C, HW), jnp.float32),
        grid_spec=pltpu.PrefetchScalarGridSpec(
            num_scalar_prefetch=0,
            grid=(B, n_rt),
            in_specs=[
                pl.BlockSpec((1, C, TW), lambda b, r: (b, 0, r)),
                pl.BlockSpec((1, C, Hh, W),
                             lambda b, r: (b, 0, jnp.maximum(r * K - 1, 0), 0)),
                pl.BlockSpec((1, C, Hh, W),
                             lambda b, r: (b, 0, jnp.minimum((r + 1) * K, NHB - 1), 0)),
                pl.BlockSpec((Cmid, C), lambda b, r: (0, 0)),
                pl.BlockSpec((9, Cmid, 1), lambda b, r: (0, 0, 0)),
                pl.BlockSpec((C, Cmid), lambda b, r: (0, 0)),
                pl.BlockSpec((1, TW), lambda b, r: (0, 0)),
                pl.BlockSpec((1, TW), lambda b, r: (0, 0)),
            ],
            out_specs=pl.BlockSpec((1, C, TW), lambda b, r: (b, 0, r)),
            scratch_shapes=[pltpu.VMEM((Cmid, LB), jnp.float32)],
        ),
        compiler_params=pltpu.CompilerParams(
            dimension_semantics=("parallel", "parallel"),
            vmem_limit_bytes=budget),
    )(x2, x4, x4, w1, w2_taps, w3, mask_nf, mask_nl)

    return out.reshape(B, C, H, W)


@functools.partial(jax.jit, static_argnames=("row_tile", "mxu_dtype"))
def norm_mlp_forward(x, ln_gamma, ln_beta, conv1_w, dw_w, conv3_w,
                     row_tile=None, mxu_dtype=jnp.float32):
    """NormMLP forward.  x: (B, C, H, W) f32 -> (B, C, H, W) f32."""
    return _norm_mlp_impl(x, ln_gamma, ln_beta, conv1_w, dw_w, conv3_w,
                          row_tile, mxu_dtype)


# ----------------------------------------------------------------------------
# Pure-JAX reference (matches the PyTorch module op-for-op).
# ----------------------------------------------------------------------------
def norm_mlp_reference(x, ln_gamma, ln_beta, conv1_w, dw_w, conv3_w):
    B, C, H, W = x.shape
    Cmid = conv1_w.shape[0]
    eps = _LN_EPS

    xt = x.reshape(B, C, H * W).transpose(0, 2, 1)            # (B, HW, C)
    mu = xt.mean(axis=-1, keepdims=True)
    var = ((xt - mu) ** 2).mean(axis=-1, keepdims=True)
    z = (xt - mu) / jnp.sqrt(var + eps) * ln_gamma + ln_beta
    x2 = z.reshape(B, C, H, W)

    dn = ('NCHW', 'OIHW', 'NCHW')
    u = jax.lax.conv_general_dilated(x2, conv1_w, (1, 1), 'VALID',
                                     dimension_numbers=dn)
    g = jax.nn.gelu(u, approximate=False)
    v = jax.lax.conv_general_dilated(g, dw_w, (1, 1), ((1, 1), (1, 1)),
                                     dimension_numbers=dn,
                                     feature_group_count=Cmid)
    g2 = jax.nn.gelu(v, approximate=False)
    out = jax.lax.conv_general_dilated(g2, conv3_w, (1, 1), 'VALID',
                                       dimension_numbers=dn)
    return out


if __name__ == "__main__":
    def run_case(B, C, H, W, mult, row_tile, mxu_dtype, rtol, atol, seed):
        Cmid = C * mult
        key = jax.random.PRNGKey(seed)
        kx, k1, k2, k3, kg, kb = jax.random.split(key, 6)
        x = jax.random.normal(kx, (B, C, H, W), dtype=jnp.float32)
        # Conv2d default init scale: U(-1/sqrt(fan_in), 1/sqrt(fan_in)).
        conv1_w = jax.random.uniform(k1, (Cmid, C, 1, 1), jnp.float32, -1., 1.) / math.sqrt(C)
        dw_w = jax.random.uniform(k2, (Cmid, 1, 3, 3), jnp.float32, -1., 1.) / 3.0
        conv3_w = jax.random.uniform(k3, (C, Cmid, 1, 1), jnp.float32, -1., 1.) / math.sqrt(Cmid)
        ln_gamma = 1.0 + 0.1 * jax.random.normal(kg, (C,), dtype=jnp.float32)
        ln_beta = 0.1 * jax.random.normal(kb, (C,), dtype=jnp.float32)

        y = norm_mlp_forward(x, ln_gamma, ln_beta, conv1_w, dw_w, conv3_w,
                             row_tile=row_tile, mxu_dtype=mxu_dtype)
        y = jax.block_until_ready(y)
        y_ref = norm_mlp_reference(x, ln_gamma, ln_beta, conv1_w, dw_w, conv3_w)
        assert y.shape == (B, C, H, W), y.shape
        np.testing.assert_allclose(np.asarray(y), np.asarray(y_ref),
                                   rtol=rtol, atol=atol)

    # f32, forced row-tiling (H/TH = 2) so the vertical-halo path is exercised.
    run_case(2, 8, 16, 16, 2, 8, jnp.float32, 1e-4, 1e-5, 0)
    # f32, auto tiling with H not a multiple of 8 (whole-image fallback path).
    run_case(2, 8, 12, 32, 2, None, jnp.float32, 1e-4, 1e-5, 1)
    # bf16 MXU operands (f32 accumulation): looser parity vs the f32 reference.
    run_case(2, 8, 16, 16, 2, 8, jnp.bfloat16, 5e-2, 5e-2, 2)
    print("KERNEL_OK")
</pallas_src>

<mosaic_0001>
module attributes {stable_mosaic.version = 11 : i64} {
  func.func @_layernorm_kernel(%arg0: i32, %arg1: i32, %arg2: memref<2x8x256xf32, #tpu.memory_space<vmem>>, %arg3: memref<1x8x1xf32, #tpu.memory_space<vmem>>, %arg4: memref<1x8x1xf32, #tpu.memory_space<vmem>>, %arg5: memref<2x256x8xf32, #tpu.memory_space<vmem>>) attributes {dimension_semantics = [#tpu.dimension_semantics<parallel>, #tpu.dimension_semantics<parallel>], iteration_bounds = array<i64: 1, 1>, scalar_prefetch = 0 : i64, scratch_operands = 0 : i64, tpu.core_type = #tpu.core_type<tc>, window_params = [{transform_indices = @transform_0, window_bounds = array<i64: 2, 8, 256>}, {pipeline_mode = #tpu.pipeline_mode<synchronous>, transform_indices = @transform_1, window_bounds = array<i64: 1, 8, 1>}, {pipeline_mode = #tpu.pipeline_mode<synchronous>, transform_indices = @transform_2, window_bounds = array<i64: 1, 8, 1>}, {transform_indices = @transform_3, window_bounds = array<i64: 2, 256, 8>}]} {
    %c0 = arith.constant 0 : index
    %c0_0 = arith.constant 0 : index
    %c0_1 = arith.constant 0 : index
    %0 = vector.load %arg2[%c0, %c0_0, %c0_1] : memref<2x8x256xf32, #tpu.memory_space<vmem>>, vector<2x8x256xf32>
    %cst = arith.constant dense<0.000000e+00> : vector<2x256xf32>
    %1 = vector.multi_reduction <add>, %0, %cst [1] : vector<2x8x256xf32> to vector<2x256xf32>
    %2 = vector.shape_cast %1 : vector<2x256xf32> to vector<2x1x256xf32>
    %cst_2 = arith.constant 8.000000e+00 : f32
    %3 = vector.broadcast %cst_2 : f32 to vector<2x1x256xf32>
    %4 = arith.divf %2, %3 : vector<2x1x256xf32>
    %5 = vector.broadcast %4 : vector<2x1x256xf32> to vector<2x8x256xf32>
    %6 = arith.subf %0, %5 : vector<2x8x256xf32>
    %7 = arith.mulf %6, %6 : vector<2x8x256xf32>
    %cst_3 = arith.constant dense<0.000000e+00> : vector<2x256xf32>
    %8 = vector.multi_reduction <add>, %7, %cst_3 [1] : vector<2x8x256xf32> to vector<2x256xf32>
    %9 = vector.shape_cast %8 : vector<2x256xf32> to vector<2x1x256xf32>
    %cst_4 = arith.constant 8.000000e+00 : f32
    %10 = vector.broadcast %cst_4 : f32 to vector<2x1x256xf32>
    %11 = arith.divf %9, %10 : vector<2x1x256xf32>
    %cst_5 = arith.constant 9.99999974E-6 : f32
    %12 = vector.broadcast %cst_5 : f32 to vector<2x1x256xf32>
    %13 = arith.addf %11, %12 : vector<2x1x256xf32>
    %14 = math.rsqrt %13 : vector<2x1x256xf32>
    %15 = vector.broadcast %14 : vector<2x1x256xf32> to vector<2x8x256xf32>
    %16 = arith.mulf %6, %15 : vector<2x8x256xf32>
    %c0_6 = arith.constant 0 : index
    %c0_7 = arith.constant 0 : index
    %c0_8 = arith.constant 0 : index
    %17 = vector.load %arg3[%c0_6, %c0_7, %c0_8] : memref<1x8x1xf32, #tpu.memory_space<vmem>>, vector<1x8x1xf32>
    %18 = vector.broadcast %17 : vector<1x8x1xf32> to vector<2x8x256xf32>
    %19 = arith.mulf %16, %18 : vector<2x8x256xf32>
    %c0_9 = arith.constant 0 : index
    %c0_10 = arith.constant 0 : index
    %c0_11 = arith.constant 0 : index
    %20 = vector.load %arg4[%c0_9, %c0_10, %c0_11] : memref<1x8x1xf32, #tpu.memory_space<vmem>>, vector<1x8x1xf32>
    %21 = vector.broadcast %20 : vector<1x8x1xf32> to vector<2x8x256xf32>
    %22 = arith.addf %19, %21 : vector<2x8x256xf32>
    %23 = vector.extract_strided_slice %22 {offsets = [0, 0, 0], sizes = [1, 8, 256], strides = [1, 1, 1]} : vector<2x8x256xf32> to vector<1x8x256xf32>
    %24 = vector.shape_cast %23 : vector<1x8x256xf32> to vector<8x256xf32>
    %25 = tpu.transpose %24, [1, 0] : vector<8x256xf32> -> vector<256x8xf32>
    %c0_12 = arith.constant 0 : index
    %c0_13 = arith.constant 0 : index
    %c0_14 = arith.constant 0 : index
    %26 = vector.load %arg5[%c0_12, %c0_13, %c0_14] : memref<2x256x8xf32, #tpu.memory_space<vmem>>, vector<1x256x8xf32>
    %27 = vector.shape_cast %26 : vector<1x256x8xf32> to vector<256x8xf32>
    %28 = vector.shape_cast %25 : vector<256x8xf32> to vector<1x256x8xf32>
    tpu.vector_store %arg5[%c0_12, %c0_13, %c0_14], %28 {strides = array<i32>} : memref<2x256x8xf32, #tpu.memory_space<vmem>>, vector<1x256x8xf32>,
    %29 = vector.extract_strided_slice %22 {offsets = [1, 0, 0], sizes = [1, 8, 256], strides = [1, 1, 1]} : vector<2x8x256xf32> to vector<1x8x256xf32>
    %30 = vector.shape_cast %29 : vector<1x8x256xf32> to vector<8x256xf32>
    %31 = tpu.transpose %30, [1, 0] : vector<8x256xf32> -> vector<256x8xf32>
    %c1 = arith.constant 1 : index
    %c0_15 = arith.constant 0 : index
    %c0_16 = arith.constant 0 : index
    %32 = vector.load %arg5[%c1, %c0_15, %c0_16] : memref<2x256x8xf32, #tpu.memory_space<vmem>>, vector<1x256x8xf32>
    %33 = vector.shape_cast %32 : vector<1x256x8xf32> to vector<256x8xf32>
    %34 = vector.shape_cast %31 : vector<256x8xf32> to vector<1x256x8xf32>
    tpu.vector_store %arg5[%c1, %c0_15, %c0_16], %34 {strides = array<i32>} : memref<2x256x8xf32, #tpu.memory_space<vmem>>, vector<1x256x8xf32>,
    return
  }
  func.func @transform_0(%arg0: i32, %arg1: i32) -> (i32, i32, i32) {
    %c0_i32 = arith.constant 0 : i32
    %c0_i32_0 = arith.constant 0 : i32
    return %arg0, %c0_i32, %arg1 : i32, i32, i32
  }
  func.func @transform_1(%arg0: i32, %arg1: i32) -> (i32, i32, i32) {
    %c0_i32 = arith.constant 0 : i32
    %c0_i32_0 = arith.constant 0 : i32
    %c0_i32_1 = arith.constant 0 : i32
    %c0_i32_2 = arith.constant 0 : i32
    return %c0_i32, %c0_i32_0, %c0_i32_1 : i32, i32, i32
  }
  func.func @transform_2(%arg0: i32, %arg1: i32) -> (i32, i32, i32) {
    %c0_i32 = arith.constant 0 : i32
    %c0_i32_0 = arith.constant 0 : i32
    %c0_i32_1 = arith.constant 0 : i32
    %c0_i32_2 = arith.constant 0 : i32
    return %c0_i32, %c0_i32_0, %c0_i32_1 : i32, i32, i32
  }
  func.func @transform_3(%arg0: i32, %arg1: i32) -> (i32, i32, i32) {
    %c0_i32 = arith.constant 0 : i32
    %c0_i32_0 = arith.constant 0 : i32
    return %arg0, %arg1, %c0_i32 : i32, i32, i32
  }
}

module attributes {stable_mosaic.version = 11 : i64} {
  func.func @_mlp_kernel(%arg0: i32, %arg1: i32, %arg2: memref<1x8x128xf32, #tpu.memory_space<vmem>>, %arg3: memref<1x8x8x16xf32, #tpu.memory_space<vmem>>, %arg4: memref<1x8x8x16xf32, #tpu.memory_space<vmem>>, %arg5: memref<16x8xf32, #tpu.memory_space<vmem>>, %arg6: memref<9x16x1xf32, #tpu.memory_space<vmem>>, %arg7: memref<8x16xf32, #tpu.memory_space<vmem>>, %arg8: memref<1x128xf32, #tpu.memory_space<vmem>>, %arg9: memref<1x128xf32, #tpu.memory_space<vmem>>, %arg10: memref<1x8x128xf32, #tpu.memory_space<vmem>>, %arg11: memref<16x384xf32, #tpu.memory_space<vmem>>) attributes {dimension_semantics = [#tpu.dimension_semantics<parallel>, #tpu.dimension_semantics<parallel>], iteration_bounds = array<i64: 2, 2>, scalar_prefetch = 0 : i64, scratch_operands = 1 : i64, tpu.core_type = #tpu.core_type<tc>, window_params = [{transform_indices = @transform_0, window_bounds = array<i64: 1, 8, 128>}, {transform_indices = @transform_1, window_bounds = array<i64: 1, 8, 8, 16>}, {transform_indices = @transform_2, window_bounds = array<i64: 1, 8, 8, 16>}, {pipeline_mode = #tpu.pipeline_mode<synchronous>, transform_indices = @transform_3, window_bounds = array<i64: 16, 8>}, {pipeline_mode = #tpu.pipeline_mode<synchronous>, transform_indices = @transform_4, window_bounds = array<i64: 9, 16, 1>}, {pipeline_mode = #tpu.pipeline_mode<synchronous>, transform_indices = @transform_5, window_bounds = array<i64: 8, 16>}, {pipeline_mode = #tpu.pipeline_mode<synchronous>, transform_indices = @transform_6, window_bounds = array<i64: 1, 128>}, {pipeline_mode = #tpu.pipeline_mode<synchronous>, transform_indices = @transform_7, window_bounds = array<i64: 1, 128>}, {transform_indices = @transform_8, window_bounds = array<i64: 1, 8, 128>}]} {
    %c0 = arith.constant 0 : index
    %c0_0 = arith.constant 0 : index
    %0 = vector.load %arg5[%c0, %c0_0] : memref<16x8xf32, #tpu.memory_space<vmem>>, vector<16x8xf32>
    %c0_1 = arith.constant 0 : index
    %c0_2 = arith.constant 0 : index
    %c0_3 = arith.constant 0 : index
    %1 = vector.load %arg2[%c0_1, %c0_2, %c0_3] : memref<1x8x128xf32, #tpu.memory_space<vmem>>, vector<1x8x128xf32>
    %2 = vector.shape_cast %1 : vector<1x8x128xf32> to vector<8x128xf32>
    %cst = arith.constant dense<0.000000e+00> : vector<16x128xf32>
    %3 = tpu.matmul %0, %2, %cst {dimension_numbers = #tpu.dot_dimension_numbers<[1], [0], [0], [1], [0, 0, 1, 1], [], []>} : vector<16x8xf32>, vector<8x128xf32>, vector<16x128xf32> -> vector<16x128xf32>
    %cst_4 = arith.constant 0.707106769 : f32
    %4 = vector.broadcast %cst_4 : f32 to vector<16x128xf32>
    %5 = arith.mulf %3, %4 : vector<16x128xf32>
    %6 = math.absf %5 : vector<16x128xf32>
    %cst_5 = arith.constant 0.327591091 : f32
    %7 = vector.broadcast %cst_5 : f32 to vector<16x128xf32>
    %8 = arith.mulf %7, %6 : vector<16x128xf32>
    %cst_6 = arith.constant 1.000000e+00 : f32
    %9 = vector.broadcast %cst_6 : f32 to vector<16x128xf32>
    %10 = arith.addf %9, %8 : vector<16x128xf32>
    %11 = tpu.reciprocal %10 : vector<16x128xf32> -> vector<16x128xf32>
    %cst_7 = arith.constant 1.06140542 : f32
    %12 = vector.broadcast %cst_7 : f32 to vector<16x128xf32>
    %13 = arith.mulf %11, %12 : vector<16x128xf32>
    %cst_8 = arith.constant -1.45315206 : f32
    %14 = vector.broadcast %cst_8 : f32 to vector<16x128xf32>
    %15 = arith.addf %14, %13 : vector<16x128xf32>
    %16 = arith.mulf %11, %15 : vector<16x128xf32>
    %cst_9 = arith.constant 1.42141378 : f32
    %17 = vector.broadcast %cst_9 : f32 to vector<16x128xf32>
    %18 = arith.addf %17, %16 : vector<16x128xf32>
    %19 = arith.mulf %11, %18 : vector<16x128xf32>
    %cst_10 = arith.constant -0.284496725 : f32
    %20 = vector.broadcast %cst_10 : f32 to vector<16x128xf32>
    %21 = arith.addf %20, %19 : vector<16x128xf32>
    %22 = arith.mulf %11, %21 : vector<16x128xf32>
    %cst_11 = arith.constant 0.254829586 : f32
    %23 = vector.broadcast %cst_11 : f32 to vector<16x128xf32>
    %24 = arith.addf %23, %22 : vector<16x128xf32>
    %25 = arith.mulf %11, %24 : vector<16x128xf32>
    %cst_12 = arith.constant 0.000000e+00 : f32
    %26 = vector.broadcast %cst_12 : f32 to vector<16x128xf32>
    %27 = arith.subf %26, %6 : vector<16x128xf32>
    %28 = arith.mulf %27, %6 : vector<16x128xf32>
    %29 = math.exp %28 : vector<16x128xf32>
    %30 = arith.mulf %25, %29 : vector<16x128xf32>
    %cst_13 = arith.constant 1.000000e+00 : f32
    %31 = vector.broadcast %cst_13 : f32 to vector<16x128xf32>
    %32 = arith.subf %31, %30 : vector<16x128xf32>
    %cst_14 = arith.constant 0.000000e+00 : f32
    %33 = vector.broadcast %cst_14 : f32 to vector<16x128xf32>
    %34 = arith.cmpf olt, %5, %33 : vector<16x128xf32>
    %cst_15 = arith.constant 0.000000e+00 : f32
    %35 = vector.broadcast %cst_15 : f32 to vector<16x128xf32>
    %36 = arith.subf %35, %32 : vector<16x128xf32>
    %37 = arith.select %34, %36, %32 : vector<16x128xi1>, vector<16x128xf32>
    %cst_16 = arith.constant 5.000000e-01 : f32
    %38 = vector.broadcast %cst_16 : f32 to vector<16x128xf32>
    %39 = arith.mulf %38, %3 : vector<16x128xf32>
    %cst_17 = arith.constant 1.000000e+00 : f32
    %40 = vector.broadcast %cst_17 : f32 to vector<16x128xf32>
    %41 = arith.addf %40, %37 : vector<16x128xf32>
    %42 = arith.mulf %39, %41 : vector<16x128xf32>
    %c0_18 = arith.constant 0 : index
    %c0_19 = arith.constant 0 : index
    %c0_20 = arith.constant 0 : index
    %c0_21 = arith.constant 0 : index
    %43 = vector.load %arg3[%c0_18, %c0_19, %c0_20, %c0_21] : memref<1x8x8x16xf32, #tpu.memory_space<vmem>>, vector<1x8x8x16xf32>
    %44 = vector.shape_cast %43 : vector<1x8x8x16xf32> to vector<8x8x16xf32>
    %45 = vector.extract_strided_slice %44 {offsets = [0, 7, 0], sizes = [8, 1, 16], strides = [1, 1, 1]} : vector<8x8x16xf32> to vector<8x1x16xf32>
    %46 = vector.shape_cast %45 : vector<8x1x16xf32> to vector<8x16xf32>
    %c0_22 = arith.constant 0 : index
    %c0_23 = arith.constant 0 : index
    %c0_24 = arith.constant 0 : index
    %c0_25 = arith.constant 0 : index
    %47 = vector.load %arg4[%c0_22, %c0_23, %c0_24, %c0_25] : memref<1x8x8x16xf32, #tpu.memory_space<vmem>>, vector<1x8x8x16xf32>
    %48 = vector.shape_cast %47 : vector<1x8x8x16xf32> to vector<8x8x16xf32>
    %49 = vector.extract_strided_slice %48 {offsets = [0, 0, 0], sizes = [8, 1, 16], strides = [1, 1, 1]} : vector<8x8x16xf32> to vector<8x1x16xf32>
    %50 = vector.shape_cast %49 : vector<8x1x16xf32> to vector<8x16xf32>
    %cst_26 = arith.constant dense<0.000000e+00> : vector<16x16xf32>
    %51 = tpu.matmul %0, %46, %cst_26 {dimension_numbers = #tpu.dot_dimension_numbers<[1], [0], [0], [1], [0, 0, 1, 1], [], []>} : vector<16x8xf32>, vector<8x16xf32>, vector<16x16xf32> -> vector<16x16xf32>
    %cst_27 = arith.constant 0.707106769 : f32
    %52 = vector.broadcast %cst_27 : f32 to vector<16x16xf32>
    %53 = arith.mulf %51, %52 : vector<16x16xf32>
    %54 = math.absf %53 : vector<16x16xf32>
    %cst_28 = arith.constant 0.327591091 : f32
    %55 = vector.broadcast %cst_28 : f32 to vector<16x16xf32>
    %56 = arith.mulf %55, %54 : vector<16x16xf32>
    %cst_29 = arith.constant 1.000000e+00 : f32
    %57 = vector.broadcast %cst_29 : f32 to vector<16x16xf32>
    %58 = arith.addf %57, %56 : vector<16x16xf32>
    %59 = tpu.reciprocal %58 : vector<16x16xf32> -> vector<16x16xf32>
    %cst_30 = arith.constant 1.06140542 : f32
    %60 = vector.broadcast %cst_30 : f32 to vector<16x16xf32>
    %61 = arith.mulf %59, %60 : vector<16x16xf32>
    %cst_31 = arith.constant -1.45315206 : f32
    %62 = vector.broadcast %cst_31 : f32 to vector<16x16xf32>
    %63 = arith.addf %62, %61 : vector<16x16xf32>
    %64 = arith.mulf %59, %63 : vector<16x16xf32>
    %cst_32 = arith.constant 1.42141378 : f32
    %65 = vector.broadcast %cst_32 : f32 to vector<16x16xf32>
    %66 = arith.addf %65, %64 : vector<16x16xf32>
    %67 = arith.mulf %59, %66 : vector<16x16xf32>
    %cst_33 = arith.constant -0.284496725 : f32
    %68 = vector.broadcast %cst_33 : f32 to vector<16x16xf32>
    %69 = arith.addf %68, %67 : vector<16x16xf32>
    %70 = arith.mulf %59, %69 : vector<16x16xf32>
    %cst_34 = arith.constant 0.254829586 : f32
    %71 = vector.broadcast %cst_34 : f32 to vector<16x16xf32>
    %72 = arith.addf %71, %70 : vector<16x16xf32>
    %73 = arith.mulf %59, %72 : vector<16x16xf32>
    %cst_35 = arith.constant 0.000000e+00 : f32
    %74 = vector.broadcast %cst_35 : f32 to vector<16x16xf32>
    %75 = arith.subf %74, %54 : vector<16x16xf32>
    %76 = arith.mulf %75, %54 : vector<16x16xf32>
    %77 = math.exp %76 : vector<16x16xf32>
    %78 = arith.mulf %73, %77 : vector<16x16xf32>
    %cst_36 = arith.constant 1.000000e+00 : f32
    %79 = vector.broadcast %cst_36 : f32 to vector<16x16xf32>
    %80 = arith.subf %79, %78 : vector<16x16xf32>
    %cst_37 = arith.constant 0.000000e+00 : f32
    %81 = vector.broadcast %cst_37 : f32 to vector<16x16xf32>
    %82 = arith.cmpf olt, %53, %81 : vector<16x16xf32>
    %cst_38 = arith.constant 0.000000e+00 : f32
    %83 = vector.broadcast %cst_38 : f32 to vector<16x16xf32>
    %84 = arith.subf %83, %80 : vector<16x16xf32>
    %85 = arith.select %82, %84, %80 : vector<16x16xi1>, vector<16x16xf32>
    %cst_39 = arith.constant 5.000000e-01 : f32
    %86 = vector.broadcast %cst_39 : f32 to vector<16x16xf32>
    %87 = arith.mulf %86, %51 : vector<16x16xf32>
    %cst_40 = arith.constant 1.000000e+00 : f32
    %88 = vector.broadcast %cst_40 : f32 to vector<16x16xf32>
    %89 = arith.addf %88, %85 : vector<16x16xf32>
    %90 = arith.mulf %87, %89 : vector<16x16xf32>
    %cst_41 = arith.constant dense<0.000000e+00> : vector<16x16xf32>
    %91 = tpu.matmul %0, %50, %cst_41 {dimension_numbers = #tpu.dot_dimension_numbers<[1], [0], [0], [1], [0, 0, 1, 1], [], []>} : vector<16x8xf32>, vector<8x16xf32>, vector<16x16xf32> -> vector<16x16xf32>
    %cst_42 = arith.constant 0.707106769 : f32
    %92 = vector.broadcast %cst_42 : f32 to vector<16x16xf32>
    %93 = arith.mulf %91, %92 : vector<16x16xf32>
    %94 = math.absf %93 : vector<16x16xf32>
    %cst_43 = arith.constant 0.327591091 : f32
    %95 = vector.broadcast %cst_43 : f32 to vector<16x16xf32>
    %96 = arith.mulf %95, %94 : vector<16x16xf32>
    %cst_44 = arith.constant 1.000000e+00 : f32
    %97 = vector.broadcast %cst_44 : f32 to vector<16x16xf32>
    %98 = arith.addf %97, %96 : vector<16x16xf32>
    %99 = tpu.reciprocal %98 : vector<16x16xf32> -> vector<16x16xf32>
    %cst_45 = arith.constant 1.06140542 : f32
    %100 = vector.broadcast %cst_45 : f32 to vector<16x16xf32>
    %101 = arith.mulf %99, %100 : vector<16x16xf32>
    %cst_46 = arith.constant -1.45315206 : f32
    %102 = vector.broadcast %cst_46 : f32 to vector<16x16xf32>
    %103 = arith.addf %102, %101 : vector<16x16xf32>
    %104 = arith.mulf %99, %103 : vector<16x16xf32>
    %cst_47 = arith.constant 1.42141378 : f32
    %105 = vector.broadcast %cst_47 : f32 to vector<16x16xf32>
    %106 = arith.addf %105, %104 : vector<16x16xf32>
    %107 = arith.mulf %99, %106 : vector<16x16xf32>
    %cst_48 = arith.constant -0.284496725 : f32
    %108 = vector.broadcast %cst_48 : f32 to vector<16x16xf32>
    %109 = arith.addf %108, %107 : vector<16x16xf32>
    %110 = arith.mulf %99, %109 : vector<16x16xf32>
    %cst_49 = arith.constant 0.254829586 : f32
    %111 = vector.broadcast %cst_49 : f32 to vector<16x16xf32>
    %112 = arith.addf %111, %110 : vector<16x16xf32>
    %113 = arith.mulf %99, %112 : vector<16x16xf32>
    %cst_50 = arith.constant 0.000000e+00 : f32
    %114 = vector.broadcast %cst_50 : f32 to vector<16x16xf32>
    %115 = arith.subf %114, %94 : vector<16x16xf32>
    %116 = arith.mulf %115, %94 : vector<16x16xf32>
    %117 = math.exp %116 : vector<16x16xf32>
    %118 = arith.mulf %113, %117 : vector<16x16xf32>
    %cst_51 = arith.constant 1.000000e+00 : f32
    %119 = vector.broadcast %cst_51 : f32 to vector<16x16xf32>
    %120 = arith.subf %119, %118 : vector<16x16xf32>
    %cst_52 = arith.constant 0.000000e+00 : f32
    %121 = vector.broadcast %cst_52 : f32 to vector<16x16xf32>
    %122 = arith.cmpf olt, %93, %121 : vector<16x16xf32>
    %cst_53 = arith.constant 0.000000e+00 : f32
    %123 = vector.broadcast %cst_53 : f32 to vector<16x16xf32>
    %124 = arith.subf %123, %120 : vector<16x16xf32>
    %125 = arith.select %122, %124, %120 : vector<16x16xi1>, vector<16x16xf32>
    %cst_54 = arith.constant 5.000000e-01 : f32
    %126 = vector.broadcast %cst_54 : f32 to vector<16x16xf32>
    %127 = arith.mulf %126, %91 : vector<16x16xf32>
    %cst_55 = arith.constant 1.000000e+00 : f32
    %128 = vector.broadcast %cst_55 : f32 to vector<16x16xf32>
    %129 = arith.addf %128, %125 : vector<16x16xf32>
    %130 = arith.mulf %127, %129 : vector<16x16xf32>
    %c0_i32 = arith.constant 0 : i32
    %131 = arith.cmpi sgt, %arg1, %c0_i32 : i32
    %132 = arith.extui %131 : i1 to i32
    %133 = arith.sitofp %132 : i32 to f32
    %134 = vector.broadcast %133 : f32 to vector<16x16xf32>
    %135 = arith.mulf %90, %134 : vector<16x16xf32>
    %c1_i32 = arith.constant 1 : i32
    %136 = arith.cmpi slt, %arg1, %c1_i32 : i32
    %137 = arith.extui %136 : i1 to i32
    %138 = arith.sitofp %137 : i32 to f32
    %139 = vector.broadcast %138 : f32 to vector<16x16xf32>
    %140 = arith.mulf %130, %139 : vector<16x16xf32>
    %cst_56 = arith.constant 0.000000e+00 : f32
    %141 = vector.broadcast %cst_56 : f32 to vector<16x112xf32>
    %c0_57 = arith.constant 0 : index
    %c0_58 = arith.constant 0 : index
    %142 = vector.load %arg11[%c0_57, %c0_58] : memref<16x384xf32, #tpu.memory_space<vmem>>, vector<16x112xf32>
    tpu.vector_store %arg11[%c0_57, %c0_58], %141 {strides = array<i32>} : memref<16x384xf32, #tpu.memory_space<vmem>>, vector<16x112xf32>,
    %c0_59 = arith.constant 0 : index
    %c112 = arith.constant 112 : index
    %143 = vector.load %arg11[%c0_59, %c112] : memref<16x384xf32, #tpu.memory_space<vmem>>, vector<16x16xf32>
    tpu.vector_store %arg11[%c0_59, %c112], %135 {strides = array<i32>} : memref<16x384xf32, #tpu.memory_space<vmem>>, vector<16x16xf32>,
    %c0_60 = arith.constant 0 : index
    %c128 = arith.constant 128 : index
    %144 = vector.load %arg11[%c0_60, %c128] : memref<16x384xf32, #tpu.memory_space<vmem>>, vector<16x128xf32>
    tpu.vector_store %arg11[%c0_60, %c128], %42 {strides = array<i32>} : memref<16x384xf32, #tpu.memory_space<vmem>>, vector<16x128xf32>,
    %c0_61 = arith.constant 0 : index
    %c256 = arith.constant 256 : index
    %145 = vector.load %arg11[%c0_61, %c256] : memref<16x384xf32, #tpu.memory_space<vmem>>, vector<16x16xf32>
    tpu.vector_store %arg11[%c0_61, %c256], %140 {strides = array<i32>} : memref<16x384xf32, #tpu.memory_space<vmem>>, vector<16x16xf32>,
    %cst_62 = arith.constant 0.000000e+00 : f32
    %146 = vector.broadcast %cst_62 : f32 to vector<16x112xf32>
    %c0_63 = arith.constant 0 : index
    %c272 = arith.constant 272 : index
    %147 = vector.load %arg11[%c0_63, %c272] : memref<16x384xf32, #tpu.memory_space<vmem>>, vector<16x112xf32>
    tpu.vector_store %arg11[%c0_63, %c272], %146 {strides = array<i32>} : memref<16x384xf32, #tpu.memory_space<vmem>>, vector<16x112xf32>,
    %c0_64 = arith.constant 0 : index
    %c0_65 = arith.constant 0 : index
    %c0_66 = arith.constant 0 : index
    %148 = vector.load %arg6[%c0_64, %c0_65, %c0_66] : memref<9x16x1xf32, #tpu.memory_space<vmem>>, vector<9x16x1xf32>
    %149 = vector.extract_strided_slice %148 {offsets = [4, 0, 0], sizes = [1, 16, 1], strides = [1, 1, 1]} : vector<9x16x1xf32> to vector<1x16x1xf32>
    %150 = vector.shape_cast %149 : vector<1x16x1xf32> to vector<16x1xf32>
    %151 = vector.broadcast %150 : vector<16x1xf32> to vector<16x128xf32>
    %152 = arith.mulf %151, %42 : vector<16x128xf32>
    %153 = vector.extract_strided_slice %148 {offsets = [1, 0, 0], sizes = [1, 16, 1], strides = [1, 1, 1]} : vector<9x16x1xf32> to vector<1x16x1xf32>
    %154 = vector.shape_cast %153 : vector<1x16x1xf32> to vector<16x1xf32>
    %c0_67 = arith.constant 0 : index
    %c112_68 = arith.constant 112 : index
    %155 = vector.load %arg11[%c0_67, %c112_68] : memref<16x384xf32, #tpu.memory_space<vmem>>, vector<16x128xf32>
    %156 = vector.broadcast %154 : vector<16x1xf32> to vector<16x128xf32>
    %157 = arith.mulf %156, %155 : vector<16x128xf32>
    %158 = arith.addf %152, %157 : vector<16x128xf32>
    %159 = vector.extract_strided_slice %148 {offsets = [7, 0, 0], sizes = [1, 16, 1], strides = [1, 1, 1]} : vector<9x16x1xf32> to vector<1x16x1xf32>
    %160 = vector.shape_cast %159 : vector<1x16x1xf32> to vector<16x1xf32>
    %c0_69 = arith.constant 0 : index
    %c144 = arith.constant 144 : index
    %161 = vector.load %arg11[%c0_69, %c144] : memref<16x384xf32, #tpu.memory_space<vmem>>, vector<16x128xf32>
    %162 = vector.broadcast %160 : vector<16x1xf32> to vector<16x128xf32>
    %163 = arith.mulf %162, %161 : vector<16x128xf32>
    %164 = arith.addf %158, %163 : vector<16x128xf32>
    %165 = vector.extract_strided_slice %148 {offsets = [0, 0, 0], sizes = [1, 16, 1], strides = [1, 1, 1]} : vector<9x16x1xf32> to vector<1x16x1xf32>
    %166 = vector.shape_cast %165 : vector<1x16x1xf32> to vector<16x1xf32>
    %c0_70 = arith.constant 0 : index
    %c111 = arith.constant 111 : index
    %167 = vector.load %arg11[%c0_70, %c111] : memref<16x384xf32, #tpu.memory_space<vmem>>, vector<16x128xf32>
    %168 = vector.broadcast %166 : vector<16x1xf32> to vector<16x128xf32>
    %169 = arith.mulf %168, %167 : vector<16x128xf32>
    %170 = vector.extract_strided_slice %148 {offsets = [3, 0, 0], sizes = [1, 16, 1], strides = [1, 1, 1]} : vector<9x16x1xf32> to vector<1x16x1xf32>
    %171 = vector.shape_cast %170 : vector<1x16x1xf32> to vector<16x1xf32>
    %c0_71 = arith.constant 0 : index
    %c127 = arith.constant 127 : index
    %172 = vector.load %arg11[%c0_71, %c127] : memref<16x384xf32, #tpu.memory_space<vmem>>, vector<16x128xf32>
    %173 = vector.broadcast %171 : vector<16x1xf32> to vector<16x128xf32>
    %174 = arith.mulf %173, %172 : vector<16x128xf32>
    %175 = arith.addf %169, %174 : vector<16x128xf32>
    %176 = vector.extract_strided_slice %148 {offsets = [6, 0, 0], sizes = [1, 16, 1], strides = [1, 1, 1]} : vector<9x16x1xf32> to vector<1x16x1xf32>
    %177 = vector.shape_cast %176 : vector<1x16x1xf32> to vector<16x1xf32>
    %c0_72 = arith.constant 0 : index
    %c143 = arith.constant 143 : index
    %178 = vector.load %arg11[%c0_72, %c143] : memref<16x384xf32, #tpu.memory_space<vmem>>, vector<16x128xf32>
    %179 = vector.broadcast %177 : vector<16x1xf32> to vector<16x128xf32>
    %180 = arith.mulf %179, %178 : vector<16x128xf32>
    %181 = arith.addf %175, %180 : vector<16x128xf32>
    %182 = vector.extract_strided_slice %148 {offsets = [2, 0, 0], sizes = [1, 16, 1], strides = [1, 1, 1]} : vector<9x16x1xf32> to vector<1x16x1xf32>
    %183 = vector.shape_cast %182 : vector<1x16x1xf32> to vector<16x1xf32>
    %c0_73 = arith.constant 0 : index
    %c113 = arith.constant 113 : index
    %184 = vector.load %arg11[%c0_73, %c113] : memref<16x384xf32, #tpu.memory_space<vmem>>, vector<16x128xf32>
    %185 = vector.broadcast %183 : vector<16x1xf32> to vector<16x128xf32>
    %186 = arith.mulf %185, %184 : vector<16x128xf32>
    %187 = vector.extract_strided_slice %148 {offsets = [5, 0, 0], sizes = [1, 16, 1], strides = [1, 1, 1]} : vector<9x16x1xf32> to vector<1x16x1xf32>
    %188 = vector.shape_cast %187 : vector<1x16x1xf32> to vector<16x1xf32>
    %c0_74 = arith.constant 0 : index
    %c129 = arith.constant 129 : index
    %189 = vector.load %arg11[%c0_74, %c129] : memref<16x384xf32, #tpu.memory_space<vmem>>, vector<16x128xf32>
    %190 = vector.broadcast %188 : vector<16x1xf32> to vector<16x128xf32>
    %191 = arith.mulf %190, %189 : vector<16x128xf32>
    %192 = arith.addf %186, %191 : vector<16x128xf32>
    %193 = vector.extract_strided_slice %148 {offsets = [8, 0, 0], sizes = [1, 16, 1], strides = [1, 1, 1]} : vector<9x16x1xf32> to vector<1x16x1xf32>
    %194 = vector.shape_cast %193 : vector<1x16x1xf32> to vector<16x1xf32>
    %c0_75 = arith.constant 0 : index
    %c145 = arith.constant 145 : index
    %195 = vector.load %arg11[%c0_75, %c145] : memref<16x384xf32, #tpu.memory_space<vmem>>, vector<16x128xf32>
    %196 = vector.broadcast %194 : vector<16x1xf32> to vector<16x128xf32>
    %197 = arith.mulf %196, %195 : vector<16x128xf32>
    %198 = arith.addf %192, %197 : vector<16x128xf32>
    %c0_76 = arith.constant 0 : index
    %c0_77 = arith.constant 0 : index
    %199 = vector.load %arg8[%c0_76, %c0_77] : memref<1x128xf32, #tpu.memory_space<vmem>>, vector<1x128xf32>
    %200 = vector.broadcast %199 : vector<1x128xf32> to vector<16x128xf32>
    %201 = arith.mulf %181, %200 : vector<16x128xf32>
    %202 = arith.addf %164, %201 : vector<16x128xf32>
    %c0_78 = arith.constant 0 : index
    %c0_79 = arith.constant 0 : index
    %203 = vector.load %arg9[%c0_78, %c0_79] : memref<1x128xf32, #tpu.memory_space<vmem>>, vector<1x128xf32>
    %204 = vector.broadcast %203 : vector<1x128xf32> to vector<16x128xf32>
    %205 = arith.mulf %198, %204 : vector<16x128xf32>
    %206 = arith.addf %202, %205 : vector<16x128xf32>
    %cst_80 = arith.constant 0.707106769 : f32
    %207 = vector.broadcast %cst_80 : f32 to vector<16x128xf32>
    %208 = arith.mulf %206, %207 : vector<16x128xf32>
    %209 = math.absf %208 : vector<16x128xf32>
    %cst_81 = arith.constant 0.327591091 : f32
    %210 = vector.broadcast %cst_81 : f32 to vector<16x128xf32>
    %211 = arith.mulf %210, %209 : vector<16x128xf32>
    %cst_82 = arith.constant 1.000000e+00 : f32
    %212 = vector.broadcast %cst_82 : f32 to vector<16x128xf32>
    %213 = arith.addf %212, %211 : vector<16x128xf32>
    %214 = tpu.reciprocal %213 : vector<16x128xf32> -> vector<16x128xf32>
    %cst_83 = arith.constant 1.06140542 : f32
    %215 = vector.broadcast %cst_83 : f32 to vector<16x128xf32>
    %216 = arith.mulf %214, %215 : vector<16x128xf32>
    %cst_84 = arith.constant -1.45315206 : f32
    %217 = vector.broadcast %cst_84 : f32 to vector<16x128xf32>
    %218 = arith.addf %217, %216 : vector<16x128xf32>
    %219 = arith.mulf %214, %218 : vector<16x128xf32>
    %cst_85 = arith.constant 1.42141378 : f32
    %220 = vector.broadcast %cst_85 : f32 to vector<16x128xf32>
    %221 = arith.addf %220, %219 : vector<16x128xf32>
    %222 = arith.mulf %214, %221 : vector<16x128xf32>
    %cst_86 = arith.constant -0.284496725 : f32
    %223 = vector.broadcast %cst_86 : f32 to vector<16x128xf32>
    %224 = arith.addf %223, %222 : vector<16x128xf32>
    %225 = arith.mulf %214, %224 : vector<16x128xf32>
    %cst_87 = arith.constant 0.254829586 : f32
    %226 = vector.broadcast %cst_87 : f32 to vector<16x128xf32>
    %227 = arith.addf %226, %225 : vector<16x128xf32>
    %228 = arith.mulf %214, %227 : vector<16x128xf32>
    %cst_88 = arith.constant 0.000000e+00 : f32
    %229 = vector.broadcast %cst_88 : f32 to vector<16x128xf32>
    %230 = arith.subf %229, %209 : vector<16x128xf32>
    %231 = arith.mulf %230, %209 : vector<16x128xf32>
    %232 = math.exp %231 : vector<16x128xf32>
    %233 = arith.mulf %228, %232 : vector<16x128xf32>
    %cst_89 = arith.constant 1.000000e+00 : f32
    %234 = vector.broadcast %cst_89 : f32 to vector<16x128xf32>
    %235 = arith.subf %234, %233 : vector<16x128xf32>
    %cst_90 = arith.constant 0.000000e+00 : f32
    %236 = vector.broadcast %cst_90 : f32 to vector<16x128xf32>
    %237 = arith.cmpf olt, %208, %236 : vector<16x128xf32>
    %cst_91 = arith.constant 0.000000e+00 : f32
    %238 = vector.broadcast %cst_91 : f32 to vector<16x128xf32>
    %239 = arith.subf %238, %235 : vector<16x128xf32>
    %240 = arith.select %237, %239, %235 : vector<16x128xi1>, vector<16x128xf32>
    %cst_92 = arith.constant 5.000000e-01 : f32
    %241 = vector.broadcast %cst_92 : f32 to vector<16x128xf32>
    %242 = arith.mulf %241, %206 : vector<16x128xf32>
    %cst_93 = arith.constant 1.000000e+00 : f32
    %243 = vector.broadcast %cst_93 : f32 to vector<16x128xf32>
    %244 = arith.addf %243, %240 : vector<16x128xf32>
    %245 = arith.mulf %242, %244 : vector<16x128xf32>
    %c0_94 = arith.constant 0 : index
    %c0_95 = arith.constant 0 : index
    %246 = vector.load %arg7[%c0_94, %c0_95] : memref<8x16xf32, #tpu.memory_space<vmem>>, vector<8x16xf32>
    %cst_96 = arith.constant dense<0.000000e+00> : vector<8x128xf32>
    %247 = tpu.matmul %246, %245, %cst_96 {dimension_numbers = #tpu.dot_dimension_numbers<[1], [0], [0], [1], [0, 0, 1, 1], [], []>} : vector<8x16xf32>, vector<16x128xf32>, vector<8x128xf32> -> vector<8x128xf32>
    %c0_97 = arith.constant 0 : index
    %c0_98 = arith.constant 0 : index
    %c0_99 = arith.constant 0 : index
    %248 = vector.load %arg10[%c0_97, %c0_98, %c0_99] : memref<1x8x128xf32, #tpu.memory_space<vmem>>, vector<1x8x128xf32>
    %249 = vector.shape_cast %248 : vector<1x8x128xf32> to vector<8x128xf32>
    %250 = vector.shape_cast %247 : vector<8x128xf32> to vector<1x8x128xf32>
    tpu.vector_store %arg10[%c0_97, %c0_98, %c0_99], %250 {strides = array<i32>} : memref<1x8x128xf32, #tpu.memory_space<vmem>>, vector<1x8x128xf32>,
    return
  }
  func.func @transform_0(%arg0: i32, %arg1: i32) -> (i32, i32, i32) {
    %c0_i32 = arith.constant 0 : i32
    %c0_i32_0 = arith.constant 0 : i32
    return %arg0, %c0_i32, %arg1 : i32, i32, i32
  }
  func.func @transform_1(%arg0: i32, %arg1: i32) -> (i32, i32, i32, i32) {
    %c1_i32 = arith.constant 1 : i32
    %0 = arith.muli %arg1, %c1_i32 : i32
    %c1_i32_0 = arith.constant 1 : i32
    %1 = arith.subi %0, %c1_i32_0 : i32
    %c0_i32 = arith.constant 0 : i32
    %2 = arith.maxsi %1, %c0_i32 : i32
    %c0_i32_1 = arith.constant 0 : i32
    %c0_i32_2 = arith.constant 0 : i32
    %c0_i32_3 = arith.constant 0 : i32
    return %arg0, %c0_i32_1, %2, %c0_i32_2 : i32, i32, i32, i32
  }
  func.func @transform_2(%arg0: i32, %arg1: i32) -> (i32, i32, i32, i32) {
    %c1_i32 = arith.constant 1 : i32
    %0 = arith.addi %arg1, %c1_i32 : i32
    %c1_i32_0 = arith.constant 1 : i32
    %1 = arith.muli %0, %c1_i32_0 : i32
    %c1_i32_1 = arith.constant 1 : i32
    %2 = arith.minsi %1, %c1_i32_1 : i32
    %c0_i32 = arith.constant 0 : i32
    %c0_i32_2 = arith.constant 0 : i32
    %c0_i32_3 = arith.constant 0 : i32
    return %arg0, %c0_i32, %2, %c0_i32_2 : i32, i32, i32, i32
  }
  func.func @transform_3(%arg0: i32, %arg1: i32) -> (i32, i32) {
    %c0_i32 = arith.constant 0 : i32
    %c0_i32_0 = arith.constant 0 : i32
    %c0_i32_1 = arith.constant 0 : i32
    return %c0_i32, %c0_i32_0 : i32, i32
  }
  func.func @transform_4(%arg0: i32, %arg1: i32) -> (i32, i32, i32) {
    %c0_i32 = arith.constant 0 : i32
    %c0_i32_0 = arith.constant 0 : i32
    %c0_i32_1 = arith.constant 0 : i32
    %c0_i32_2 = arith.constant 0 : i32
    return %c0_i32, %c0_i32_0, %c0_i32_1 : i32, i32, i32
  }
  func.func @transform_5(%arg0: i32, %arg1: i32) -> (i32, i32) {
    %c0_i32 = arith.constant 0 : i32
    %c0_i32_0 = arith.constant 0 : i32
    %c0_i32_1 = arith.constant 0 : i32
    return %c0_i32, %c0_i32_0 : i32, i32
  }
  func.func @transform_6(%arg0: i32, %arg1: i32) -> (i32, i32) {
    %c0_i32 = arith.constant 0 : i32
    %c0_i32_0 = arith.constant 0 : i32
    %c0_i32_1 = arith.constant 0 : i32
    return %c0_i32, %c0_i32_0 : i32, i32
  }
  func.func @transform_7(%arg0: i32, %arg1: i32) -> (i32, i32) {
    %c0_i32 = arith.constant 0 : i32
    %c0_i32_0 = arith.constant 0 : i32
    %c0_i32_1 = arith.constant 0 : i32
    return %c0_i32, %c0_i32_0 : i32, i32
  }
  func.func @transform_8(%arg0: i32, %arg1: i32) -> (i32, i32, i32) {
    %c0_i32 = arith.constant 0 : i32
    %c0_i32_0 = arith.constant 0 : i32
    return %arg0, %c0_i32, %arg1 : i32, i32, i32
  }
}

</mosaic_0001>

<llo_original>
// kernel: norm_mlp_forward.2
$region0: #{norm_mlp_forward.2}
  #allocation0 [shape = 'u32[]', space=smem, size = 0x4, offset = 0x4, fixed_abs, tag = 'smem constant byte address 0x4 - core index']
  #allocation1 [shape = 'u32[144,128]{1,0:T(1,128)}', space=vmem, size = 0x12000, scoped, tag = 'internal scratch']
  %s0 = inlined_call_operand.vmem [shape: f32[2,8,256], index: 0, kind: input, shape index: {}]
  %s1 = inlined_call_operand.vmem [shape: f32[1,8,1], index: 1, kind: input, shape index: {}]
  %s2 = inlined_call_operand.vmem [shape: f32[1,8,1], index: 2, kind: input, shape index: {}]
  %s3 = inlined_call_operand.vmem [shape: f32[2,256,8], index: 3, kind: output, shape index: {}]
  %s4 = sld [smem:[#allocation0]]
  $region22: #{norm_mlp_forward.2} parent=0
    _
  %s6 = ssub.s32 1, %s4
  %s7 = scalar_select 0, %s6, %s4
  // Predicated region
  $region2: #{norm_mlp_forward.2} parent=0 // pred_check
    _
  $region3: #{norm_mlp_forward.2} parent=0 // pred_check_branch
    %9 = sbr.rel (0) target = $region5
  $region4: #{norm_mlp_forward.2} parent=0 // pred_region
    _
  $region5: #{norm_mlp_forward.2} parent=0 // pred_fallthru
    _
  // Predicated region
  $region6: #{norm_mlp_forward.2} parent=0 // pred_check
    _
  $region7: #{norm_mlp_forward.2} parent=0 // pred_check_branch
    %11 = sbr.rel (0) target = $region9
  $region8: #{norm_mlp_forward.2} parent=0 // pred_region
    _
  $region9: #{norm_mlp_forward.2} parent=0 // pred_fallthru
    _
  // Predicated region
  $region10: #{norm_mlp_forward.2} parent=0 // pred_check
    _
  $region11: #{norm_mlp_forward.2} parent=0 // pred_check_branch
    %13 = sbr.rel (0) target = $region13
  $region12: #{norm_mlp_forward.2} parent=0 // pred_region
    _
  $region13: #{norm_mlp_forward.2} parent=0 // pred_fallthru
    _
  %v14 = vld [vmem:[%s0] sm:$0xff]
  %v15 = vld [vmem:[%s0 + $0x8] sm:$0xff]
  %v16 = vld [vmem:[%s0 + $0x10] sm:$0xff]
  %v17 = vld [vmem:[%s0 + $0x18] sm:$0xff]
  %v18 = vrot.slane %v14, 4
  %v19 = vadd.f32 %v14, %v18
  %v20 = vrot.slane %v19, 2
  %v21 = vadd.f32 %v19, %v20
  %v22 = vrot.slane %v21, 1
  %v23 = vadd.f32 %v21, %v22
  %v24 = vrot.slane %v15, 4
  %v25 = vadd.f32 %v15, %v24
  %v26 = vrot.slane %v25, 2
  %v27 = vadd.f32 %v25, %v26
  %v28 = vrot.slane %v27, 1
  %v29 = vadd.f32 %v27, %v28
  %v30 = vrot.slane %v16, 4
  %v31 = vadd.f32 %v16, %v30
  %v32 = vrot.slane %v31, 2
  %v33 = vadd.f32 %v31, %v32
  %v34 = vrot.slane %v33, 1
  %v35 = vadd.f32 %v33, %v34
  %v36 = vrot.slane %v17, 4
  %v37 = vadd.f32 %v17, %v36
  %v38 = vrot.slane %v37, 2
  %v39 = vadd.f32 %v37, %v38
  %v40 = vrot.slane %v39, 1
  %v41 = vadd.f32 %v39, %v40
  %v42 = vrcp.pop 8.0
  %v43 = vmul.f32 %v23, %v42
  %v44 = vmul.f32 %v29, %v42
  %v45 = vmul.f32 %v35, %v42
  %v46 = vmul.f32 %v41, %v42
  %v47 = vsub.f32 %v14, %v43
  %v48 = vsub.f32 %v15, %v44
  %v49 = vsub.f32 %v16, %v45
  %v50 = vsub.f32 %v17, %v46
  %v51 = vmul.f32 %v47, %v47
  %v52 = vmul.f32 %v48, %v48
  %v53 = vmul.f32 %v49, %v49
  %v54 = vmul.f32 %v50, %v50
  %v55 = vrot.slane %v51, 4
  %v56 = vadd.f32 %v51, %v55
  %v57 = vrot.slane %v56, 2
  %v58 = vadd.f32 %v56, %v57
  %v59 = vrot.slane %v58, 1
  %v60 = vadd.f32 %v58, %v59
  %v61 = vrot.slane %v52, 4
  %v62 = vadd.f32 %v52, %v61
  %v63 = vrot.slane %v62, 2
  %v64 = vadd.f32 %v62, %v63
  %v65 = vrot.slane %v64, 1
  %v66 = vadd.f32 %v64, %v65
  %v67 = vrot.slane %v53, 4
  %v68 = vadd.f32 %v53, %v67
  %v69 = vrot.slane %v68, 2
  %v70 = vadd.f32 %v68, %v69
  %v71 = vrot.slane %v70, 1
  %v72 = vadd.f32 %v70, %v71
  %v73 = vrot.slane %v54, 4
  %v74 = vadd.f32 %v54, %v73
  %v75 = vrot.slane %v74, 2
  %v76 = vadd.f32 %v74, %v75
  %v77 = vrot.slane %v76, 1
  %v78 = vadd.f32 %v76, %v77
  %v79 = vmul.f32 %v60, %v42
  %v80 = vmul.f32 %v66, %v42
  %v81 = vmul.f32 %v72, %v42
  %v82 = vmul.f32 %v78, %v42
  %v83 = vadd.f32 %v79, 1e-05
  %v84 = vadd.f32 %v80, 1e-05
  %v85 = vadd.f32 %v81, 1e-05
  %v86 = vadd.f32 %v82, 1e-05
  %v87 = vrsqrt.pop %v83
  %v88 = vrsqrt.pop %v84
  %v89 = vrsqrt.pop %v85
  %v90 = vrsqrt.pop %v86
  %v91 = vmul.f32 %v47, %v87
  %v92 = vmul.f32 %v48, %v88
  %v93 = vmul.f32 %v49, %v89
  %v94 = vmul.f32 %v50, %v90
  %v95 = vld [vmem:[%s1] sm:$0xff]
  %97 = vset.pattern.permute.xlu0 0
  %98 = vperm.xlu0 %97, %v95
  %v99 = vpop.permute.xlu0 %98
  %v101 = vmul.f32 %v91, %v99
  %v102 = vmul.f32 %v92, %v99
  %v103 = vmul.f32 %v93, %v99
  %v104 = vmul.f32 %v94, %v99
  %v105 = vld [vmem:[%s2] sm:$0xff]
  %107 = vset.pattern.permute.xlu0 0
  %108 = vperm.xlu0 %107, %v105
  %v109 = vpop.permute.xlu0 %108
  %v111 = vadd.f32 %v101, %v109
  %v112 = vadd.f32 %v102, %v109
  %v113 = vadd.f32 %v103, %v109
  %v114 = vadd.f32 %v104, %v109
  %115 = vxpose.xlu0.b32.start [1/16] %v111, 128
  %116 = vxpose.xlu0.b32.cont [2/16] 0.0, 128
  %117 = vxpose.xlu0.b32.cont [3/16] 0.0, 128
  %118 = vxpose.xlu0.b32.cont [4/16] 0.0, 128
  %119 = vxpose.xlu0.b32.cont [5/16] 0.0, 128
  %120 = vxpose.xlu0.b32.cont [6/16] 0.0, 128
  %121 = vxpose.xlu0.b32.cont [7/16] 0.0, 128
  %122 = vxpose.xlu0.b32.cont [8/16] 0.0, 128
  %123 = vxpose.xlu0.b32.cont [9/16] 0.0, 128
  %124 = vxpose.xlu0.b32.cont [10/16] 0.0, 128
  %125 = vxpose.xlu0.b32.cont [11/16] 0.0, 128
  %126 = vxpose.xlu0.b32.cont [12/16] 0.0, 128
  %127 = vxpose.xlu0.b32.cont [13/16] 0.0, 128
  %128 = vxpose.xlu0.b32.cont [14/16] 0.0, 128
  %129 = vxpose.xlu0.b32.cont [15/16] 0.0, 128
  %130 = vxpose.xlu0.b32.end [16/16] 0.0, 128
  %v131 = vpop.trf.xlu0
  %v132 = vpop.trf.xlu0
  %v133 = vpop.trf.xlu0
  %v134 = vpop.trf.xlu0
  %v135 = vpop.trf.xlu0
  %v136 = vpop.trf.xlu0
  %v137 = vpop.trf.xlu0
  %v138 = vpop.trf.xlu0
  %v139 = vpop.trf.xlu0
  %v140 = vpop.trf.xlu0
  %v141 = vpop.trf.xlu0
  %v142 = vpop.trf.xlu0
  %v143 = vpop.trf.xlu0
  %v144 = vpop.trf.xlu0
  %v145 = vpop.trf.xlu0
  %v146 = vpop.trf.xlu0
  %147 = vxpose.xlu0.b32.start [1/16] %v112, 128
  %148 = vxpose.xlu0.b32.cont [2/16] 0.0, 128
  %149 = vxpose.xlu0.b32.cont [3/16] 0.0, 128
  %150 = vxpose.xlu0.b32.cont [4/16] 0.0, 128
  %151 = vxpose.xlu0.b32.cont [5/16] 0.0, 128
  %152 = vxpose.xlu0.b32.cont [6/16] 0.0, 128
  %153 = vxpose.xlu0.b32.cont [7/16] 0.0, 128
  %154 = vxpose.xlu0.b32.cont [8/16] 0.0, 128
  %155 = vxpose.xlu0.b32.cont [9/16] 0.0, 128
  %156 = vxpose.xlu0.b32.cont [10/16] 0.0, 128
  %157 = vxpose.xlu0.b32.cont [11/16] 0.0, 128
  %158 = vxpose.xlu0.b32.cont [12/16] 0.0, 128
  %159 = vxpose.xlu0.b32.cont [13/16] 0.0, 128
  %160 = vxpose.xlu0.b32.cont [14/16] 0.0, 128
  %161 = vxpose.xlu0.b32.cont [15/16] 0.0, 128
  %162 = vxpose.xlu0.b32.end [16/16] 0.0, 128
  %v163 = vpop.trf.xlu0
  %v164 = vpop.trf.xlu0
  %v165 = vpop.trf.xlu0
  %v166 = vpop.trf.xlu0
  %v167 = vpop.trf.xlu0
  %v168 = vpop.trf.xlu0
  %v169 = vpop.trf.xlu0
  %v170 = vpop.trf.xlu0
  %v171 = vpop.trf.xlu0
  %v172 = vpop.trf.xlu0
  %v173 = vpop.trf.xlu0
  %v174 = vpop.trf.xlu0
  %v175 = vpop.trf.xlu0
  %v176 = vpop.trf.xlu0
  %v177 = vpop.trf.xlu0
  %v178 = vpop.trf.xlu0
  %vm179 = vcmask 64512
  %180 = vst.msk [vmem:[%s3] sm:$0xff] %vm179, %v131
  %181 = vst.msk [vmem:[%s3 + $0x8] sm:$0xff] %vm179, %v132
  %182 = vst.msk [vmem:[%s3 + $0x10] sm:$0xff] %vm179, %v133
  %183 = vst.msk [vmem:[%s3 + $0x18] sm:$0xff] %vm179, %v134
  %184 = vst.msk [vmem:[%s3 + $0x20] sm:$0xff] %vm179, %v135
  %185 = vst.msk [vmem:[%s3 + $0x28] sm:$0xff] %vm179, %v136
  %186 = vst.msk [vmem:[%s3 + $0x30] sm:$0xff] %vm179, %v137
  %187 = vst.msk [vmem:[%s3 + $0x38] sm:$0xff] %vm179, %v138
  %188 = vst.msk [vmem:[%s3 + $0x40] sm:$0xff] %vm179, %v139
  %189 = vst.msk [vmem:[%s3 + $0x48] sm:$0xff] %vm179, %v140
  %190 = vst.msk [vmem:[%s3 + $0x50] sm:$0xff] %vm179, %v141
  %191 = vst.msk [vmem:[%s3 + $0x58] sm:$0xff] %vm179, %v142
  %192 = vst.msk [vmem:[%s3 + $0x60] sm:$0xff] %vm179, %v143
  %193 = vst.msk [vmem:[%s3 + $0x68] sm:$0xff] %vm179, %v144
  %194 = vst.msk [vmem:[%s3 + $0x70] sm:$0xff] %vm179, %v145
  %195 = vst.msk [vmem:[%s3 + $0x78] sm:$0xff] %vm179, %v146
  %196 = vst.msk [vmem:[%s3 + $0x80] sm:$0xff] %vm179, %v163
  %197 = vst.msk [vmem:[%s3 + $0x88] sm:$0xff] %vm179, %v164
  %198 = vst.msk [vmem:[%s3 + $0x90] sm:$0xff] %vm179, %v165
  %199 = vst.msk [vmem:[%s3 + $0x98] sm:$0xff] %vm179, %v166
  %200 = vst.msk [vmem:[%s3 + $0xa0] sm:$0xff] %vm179, %v167
  %201 = vst.msk [vmem:[%s3 + $0xa8] sm:$0xff] %vm179, %v168
  %202 = vst.msk [vmem:[%s3 + $0xb0] sm:$0xff] %vm179, %v169
  %203 = vst.msk [vmem:[%s3 + $0xb8] sm:$0xff] %vm179, %v170
  %204 = vst.msk [vmem:[%s3 + $0xc0] sm:$0xff] %vm179, %v171
  %205 = vst.msk [vmem:[%s3 + $0xc8] sm:$0xff] %vm179, %v172
  %206 = vst.msk [vmem:[%s3 + $0xd0] sm:$0xff] %vm179, %v173
  %207 = vst.msk [vmem:[%s3 + $0xd8] sm:$0xff] %vm179, %v174
  %208 = vst.msk [vmem:[%s3 + $0xe0] sm:$0xff] %vm179, %v175
  %209 = vst.msk [vmem:[%s3 + $0xe8] sm:$0xff] %vm179, %v176
  %210 = vst.msk [vmem:[%s3 + $0xf0] sm:$0xff] %vm179, %v177
  %211 = vst.msk [vmem:[%s3 + $0xf8] sm:$0xff] %vm179, %v178
  %212 = vxpose.xlu0.b32.start [1/16] %v113, 128
  %213 = vxpose.xlu0.b32.cont [2/16] 0.0, 128
  %214 = vxpose.xlu0.b32.cont [3/16] 0.0, 128
  %215 = vxpose.xlu0.b32.cont [4/16] 0.0, 128
  %216 = vxpose.xlu0.b32.cont [5/16] 0.0, 128
  %217 = vxpose.xlu0.b32.cont [6/16] 0.0, 128
  %218 = vxpose.xlu0.b32.cont [7/16] 0.0, 128
  %219 = vxpose.xlu0.b32.cont [8/16] 0.0, 128
  %220 = vxpose.xlu0.b32.cont [9/16] 0.0, 128
  %221 = vxpose.xlu0.b32.cont [10/16] 0.0, 128
  %222 = vxpose.xlu0.b32.cont [11/16] 0.0, 128
  %223 = vxpose.xlu0.b32.cont [12/16] 0.0, 128
  %224 = vxpose.xlu0.b32.cont [13/16] 0.0, 128
  %225 = vxpose.xlu0.b32.cont [14/16] 0.0, 128
  %226 = vxpose.xlu0.b32.cont [15/16] 0.0, 128
  %227 = vxpose.xlu0.b32.end [16/16] 0.0, 128
  %v228 = vpop.trf.xlu0
  %v229 = vpop.trf.xlu0
  %v230 = vpop.trf.xlu0
  %v231 = vpop.trf.xlu0
  %v232 = vpop.trf.xlu0
  %v233 = vpop.trf.xlu0
  %v234 = vpop.trf.xlu0
  %v235 = vpop.trf.xlu0
  %v236 = vpop.trf.xlu0
  %v237 = vpop.trf.xlu0
  %v238 = vpop.trf.xlu0
  %v239 = vpop.trf.xlu0
  %v240 = vpop.trf.xlu0
  %v241 = vpop.trf.xlu0
  %v242 = vpop.trf.xlu0
  %v243 = vpop.trf.xlu0
  %244 = vxpose.xlu0.b32.start [1/16] %v114, 128
  %245 = vxpose.xlu0.b32.cont [2/16] 0.0, 128
  %246 = vxpose.xlu0.b32.cont [3/16] 0.0, 128
  %247 = vxpose.xlu0.b32.cont [4/16] 0.0, 128
  %248 = vxpose.xlu0.b32.cont [5/16] 0.0, 128
  %249 = vxpose.xlu0.b32.cont [6/16] 0.0, 128
  %250 = vxpose.xlu0.b32.cont [7/16] 0.0, 128
  %251 = vxpose.xlu0.b32.cont [8/16] 0.0, 128
  %252 = vxpose.xlu0.b32.cont [9/16] 0.0, 128
  %253 = vxpose.xlu0.b32.cont [10/16] 0.0, 128
  %254 = vxpose.xlu0.b32.cont [11/16] 0.0, 128
  %255 = vxpose.xlu0.b32.cont [12/16] 0.0, 128
  %256 = vxpose.xlu0.b32.cont [13/16] 0.0, 128
  %257 = vxpose.xlu0.b32.cont [14/16] 0.0, 128
  %258 = vxpose.xlu0.b32.cont [15/16] 0.0, 128
  %259 = vxpose.xlu0.b32.end [16/16] 0.0, 128
  %v260 = vpop.trf.xlu0
  %v261 = vpop.trf.xlu0
  %v262 = vpop.trf.xlu0
  %v263 = vpop.trf.xlu0
  %v264 = vpop.trf.xlu0
  %v265 = vpop.trf.xlu0
  %v266 = vpop.trf.xlu0
  %v267 = vpop.trf.xlu0
  %v268 = vpop.trf.xlu0
  %v269 = vpop.trf.xlu0
  %v270 = vpop.trf.xlu0
  %v271 = vpop.trf.xlu0
  %v272 = vpop.trf.xlu0
  %v273 = vpop.trf.xlu0
  %v274 = vpop.trf.xlu0
  %v275 = vpop.trf.xlu0
  %s276 = scalar_lea.vmem %s3, 256
  %277 = vst.msk [vmem:[%s276] sm:$0xff] %vm179, %v228
  %278 = vst.msk [vmem:[%s276 + $0x8] sm:$0xff] %vm179, %v229
  %279 = vst.msk [vmem:[%s276 + $0x10] sm:$0xff] %vm179, %v230
  %280 = vst.msk [vmem:[%s276 + $0x18] sm:$0xff] %vm179, %v231
  %281 = vst.msk [vmem:[%s276 + $0x20] sm:$0xff] %vm179, %v232
  %282 = vst.msk [vmem:[%s276 + $0x28] sm:$0xff] %vm179, %v233
  %283 = vst.msk [vmem:[%s276 + $0x30] sm:$0xff] %vm179, %v234
  %284 = vst.msk [vmem:[%s276 + $0x38] sm:$0xff] %vm179, %v235
  %285 = vst.msk [vmem:[%s276 + $0x40] sm:$0xff] %vm179, %v236
  %286 = vst.msk [vmem:[%s276 + $0x48] sm:$0xff] %vm179, %v237
  %287 = vst.msk [vmem:[%s276 + $0x50] sm:$0xff] %vm179, %v238
  %288 = vst.msk [vmem:[%s276 + $0x58] sm:$0xff] %vm179, %v239
  %289 = vst.msk [vmem:[%s276 + $0x60] sm:$0xff] %vm179, %v240
  %290 = vst.msk [vmem:[%s276 + $0x68] sm:$0xff] %vm179, %v241
  %291 = vst.msk [vmem:[%s276 + $0x70] sm:$0xff] %vm179, %v242
  %292 = vst.msk [vmem:[%s276 + $0x78] sm:$0xff] %vm179, %v243
  %293 = vst.msk [vmem:[%s276 + $0x80] sm:$0xff] %vm179, %v260
  %294 = vst.msk [vmem:[%s276 + $0x88] sm:$0xff] %vm179, %v261
  %295 = vst.msk [vmem:[%s276 + $0x90] sm:$0xff] %vm179, %v262
  %296 = vst.msk [vmem:[%s276 + $0x98] sm:$0xff] %vm179, %v263
  %297 = vst.msk [vmem:[%s276 + $0xa0] sm:$0xff] %vm179, %v264
  %298 = vst.msk [vmem:[%s276 + $0xa8] sm:$0xff] %vm179, %v265
  %299 = vst.msk [vmem:[%s276 + $0xb0] sm:$0xff] %vm179, %v266
  %300 = vst.msk [vmem:[%s276 + $0xb8] sm:$0xff] %vm179, %v267
  %301 = vst.msk [vmem:[%s276 + $0xc0] sm:$0xff] %vm179, %v268
  %302 = vst.msk [vmem:[%s276 + $0xc8] sm:$0xff] %vm179, %v269
  %303 = vst.msk [vmem:[%s276 + $0xd0] sm:$0xff] %vm179, %v270
  %304 = vst.msk [vmem:[%s276 + $0xd8] sm:$0xff] %vm179, %v271
  %305 = vst.msk [vmem:[%s276 + $0xe0] sm:$0xff] %vm179, %v272
  %306 = vst.msk [vmem:[%s276 + $0xe8] sm:$0xff] %vm179, %v273
  %307 = vst.msk [vmem:[%s276 + $0xf0] sm:$0xff] %vm179, %v274
  %308 = vst.msk [vmem:[%s276 + $0xf8] sm:$0xff] %vm179, %v275
  // Predicated region
  $region14: #{norm_mlp_forward.2} parent=0 // pred_check
    _
  $region15: #{norm_mlp_forward.2} parent=0 // pred_check_branch
    %310 = sbr.rel (0) target = $region17
  $region16: #{norm_mlp_forward.2} parent=0 // pred_region
    _
  $region17: #{norm_mlp_forward.2} parent=0 // pred_fallthru
    _
  // Predicated region
  $region18: #{norm_mlp_forward.2} parent=0 // pred_check
    _
  $region19: #{norm_mlp_forward.2} parent=0 // pred_check_branch
    %312 = sbr.rel (0) target = $region21
  $region20: #{norm_mlp_forward.2} parent=0 // pred_region
    _
  $region21: #{norm_mlp_forward.2} parent=0 // pred_fallthru
    _

// kernel: norm_mlp_forward.3
$region0: #{norm_mlp_forward.3}
  #allocation0 [shape = 'u32[]', space=smem, size = 0x4, offset = 0x4, fixed_abs, tag = 'smem constant byte address 0x4 - core index']
  #allocation1 [shape = 'u32[144,128]{1,0:T(1,128)}', space=vmem, size = 0x12000, scoped, tag = 'internal scratch']
  #allocation2 [shape = 'f32[16,384]{1,0:T(8,128)}', space=vmem, size = 0x6000, scoped, tag = 'scratch operand']
  %s0 = inlined_call_operand.vmem [shape: f32[2,8,256], index: 0, kind: input, shape index: {}]
  %s1 = inlined_call_operand.vmem [shape: f32[2,8,16,16], index: 1, kind: input, shape index: {}, may-alias: {1,2}]
  %s2 = inlined_call_operand.vmem [shape: f32[2,8,16,16], index: 2, kind: input, shape index: {}, may-alias: {1,2}]
  %s3 = inlined_call_operand.vmem [shape: f32[16,8], index: 3, kind: input, shape index: {}]
  %s4 = inlined_call_operand.vmem [shape: f32[9,16,1], index: 4, kind: input, shape index: {}]
  %s5 = inlined_call_operand.vmem [shape: f32[8,16], index: 5, kind: input, shape index: {}]
  %s6 = inlined_call_operand.vmem [shape: f32[1,128], index: 6, kind: input, shape index: {}]
  %s7 = inlined_call_operand.vmem [shape: f32[1,128], index: 7, kind: input, shape index: {}]
  %s8 = inlined_call_operand.vmem [shape: f32[2,8,256], index: 8, kind: output, shape index: {}]
  %s9 = sld [smem:[#allocation0]]
  $region141: #{norm_mlp_forward.3} parent=0
    _
  %s11 = ssub.s32 1, %s9
  %s12 = scalar_select 0, %s11, %s9
  $region1: #{norm_mlp_forward.3} parent=0
    #allocation3 [shape = 'u8[65536]{0}', space=vmem, size = 0x10000, scoped, tag = 'input window, operand 1']
    #allocation4 [shape = 'u8[65536]{0}', space=vmem, size = 0x10000, scoped, tag = 'input window, operand 2']
    loop: start=0, step=1, limit=6
    $region2: #{norm_mlp_forward.3} parent=1 // loop_pre_header
      _
    $region3: #{norm_mlp_forward.3} parent=1 // loop_header
      %s14 = sphi 0, %s18
      %p15 = scmp.ge.s32.totalorder %s14, 6
      %s21 = sphi 0, %s33
      %s22 = sphi 0, %s29
      %s23 = sphi 0, %s21
      %s24 = sphi 0, %s22
      %s25 = sphi 0, %s23
      %s26 = sphi 0, %s24
      %s38 = sphi 0, %s40
      %s41 = sphi 0, %s38
      %s42 = sphi 0, %s41
      %s58 = sphi 0, %s42
      %s72 = sphi 0, %s74
      %s75 = sphi 0, %s72
      %s76 = sphi 0, %s75
      %s92 = sphi 0, %s76
      %s106 = sphi 0, %s108
      %s109 = sphi 0, %s106
      %s110 = sphi 0, %s109
      %s126 = sphi 0, %s110
      %s130 = sphi 0, %s130
      %s132 = sphi 0, %s130
      %s133 = sphi 0, %s132
      %s147 = sphi 0, %s133
      %s151 = sphi 0, %s151
      %s153 = sphi 0, %s151
      %s154 = sphi 0, %s153
      %s168 = sphi 0, %s154
      %s172 = sphi 0, %s172
      %s174 = sphi 0, %s172
      %s175 = sphi 0, %s174
      %s189 = sphi 0, %s175
      %s193 = sphi 0, %s193
      %s195 = sphi 0, %s193
      %s196 = sphi 0, %s195
      %s210 = sphi 0, %s196
      %s214 = sphi 0, %s214
      %s216 = sphi 0, %s214
      %s217 = sphi 0, %s216
      %s231 = sphi 0, %s217
      %s239 = sphi 0, %s241
      %s242 = sphi 0, %s239
      %s243 = sphi 0, %s242
      %s259 = sphi 0, %s243
    $region4: #{norm_mlp_forward.3} parent=1 // loop_header_branch
      %17 = sbr.rel (%p15) target = $region8
    $region5: #{norm_mlp_forward.3} parent=1 // loop_body
      %s19 = ssub.s32 %s14, 1
      %s20 = ssub.s32 %s14, 2
      %s27 = sadd.s32 1, %s22
      %p28 = scmp.ge.s32.totalorder %s27, 2
      %s29 = scalar_select %p28, 0, %s27
      %s30 = sadd.s32 1, %s21
      %s31 = scalar_select %p28, %s30, %s21
      %p32 = scmp.ge.s32.totalorder %s31, 2
      %s33 = scalar_select %p32, 0, %s31
      %s34 = ssub.s32 %s21, %s33
      %s35 = ssub.s32 %s22, %s29
      %s36 = sor.u32 %s34, %s35
      %p37 = scmp.eq.s32.totalorder %s36, 0
      %s39 = sadd.s32 %s38, 1
      %s40 = scalar_select %p37, %s38, %s39
      %p43 = pneg %p37
      %p44 = scmp.eq.s32.totalorder %s14, 3
      %p45 = por %p43, %p44
      %p46 = scmp.ne.s32.totalorder %s38, %s41
      %p47 = scmp.eq.s32.totalorder %s14, 0
      %p48 = por %p46, %p47
      %p49 = scmp.ne.s32.totalorder %s38, %s41
      %p50 = scmp.eq.s32.totalorder %s19, 3
      %p51 = por %p49, %p50
      %p52 = scmp.ne.s32.totalorder %s41, %s42
      %p53 = scmp.eq.s32.totalorder %s19, 0
      %p54 = por %p52, %p53
      %p55 = scmp.ne.s32.totalorder %s41, %s42
      %p56 = scmp.eq.s32.totalorder %s20, 3
      %p57 = por %p55, %p56
      %p59 = scmp.ne.s32.totalorder %s42, %s58
      %p60 = scmp.eq.s32.totalorder %s20, 0
      %p61 = por %p59, %p60
      %s62 = ssub.s32 %s22, 1
      %p63 = scmp.gt.s32.totalorder %s62, 0
      %s64 = scalar_select %p63, %s62, 0
      %s65 = ssub.s32 %s29, 1
      %p66 = scmp.gt.s32.totalorder %s65, 0
      %s67 = scalar_select %p66, %s65, 0
      %s68 = ssub.s32 %s21, %s33
      %s69 = ssub.s32 %s64, %s67
      %s70 = sor.u32 %s68, %s69
      %p71 = scmp.eq.s32.totalorder %s70, 0
      %s73 = sadd.s32 %s72, 1
      %s74 = scalar_select %p71, %s72, %s73
      %p77 = pneg %p71
      %p78 = scmp.eq.s32.totalorder %s14, 3
      %p79 = por %p77, %p78
      %p80 = scmp.ne.s32.totalorder %s72, %s75
      %p81 = scmp.eq.s32.totalorder %s14, 0
      %p82 = por %p80, %p81
      %p83 = scmp.ne.s32.totalorder %s72, %s75
      %p84 = scmp.eq.s32.totalorder %s19, 3
      %p85 = por %p83, %p84
      %p86 = scmp.ne.s32.totalorder %s75, %s76
      %p87 = scmp.eq.s32.totalorder %s19, 0
      %p88 = por %p86, %p87
      %p89 = scmp.ne.s32.totalorder %s75, %s76
      %p90 = scmp.eq.s32.totalorder %s20, 3
      %p91 = por %p89, %p90
      %p93 = scmp.ne.s32.totalorder %s76, %s92
      %p94 = scmp.eq.s32.totalorder %s20, 0
      %p95 = por %p93, %p94
      %s96 = sadd.s32 %s22, 1
      %p97 = scmp.lt.s32.totalorder %s96, 1
      %s98 = scalar_select %p97, %s96, 1
      %s99 = sadd.s32 %s29, 1
      %p100 = scmp.lt.s32.totalorder %s99, 1
      %s101 = scalar_select %p100, %s99, 1
      %s102 = ssub.s32 %s21, %s33
      %s103 = ssub.s32 %s98, %s101
      %s104 = sor.u32 %s102, %s103
      %p105 = scmp.eq.s32.totalorder %s104, 0
      %s107 = sadd.s32 %s106, 1
      %s108 = scalar_select %p105, %s106, %s107
      %p111 = pneg %p105
      %p112 = scmp.eq.s32.totalorder %s14, 3
      %p113 = por %p111, %p112
      %p114 = scmp.ne.s32.totalorder %s106, %s109
      %p115 = scmp.eq.s32.totalorder %s14, 0
      %p116 = por %p114, %p115
      %p117 = scmp.ne.s32.totalorder %s106, %s109
      %p118 = scmp.eq.s32.totalorder %s19, 3
      %p119 = por %p117, %p118
      %p120 = scmp.ne.s32.totalorder %s109, %s110
      %p121 = scmp.eq.s32.totalorder %s19, 0
      %p122 = por %p120, %p121
      %p123 = scmp.ne.s32.totalorder %s109, %s110
      %p124 = scmp.eq.s32.totalorder %s20, 3
      %p125 = por %p123, %p124
      %p127 = scmp.ne.s32.totalorder %s110, %s126
      %p128 = scmp.eq.s32.totalorder %s20, 0
      %p129 = por %p127, %p128
      %s131 = sadd.s32 %s130, 1
      %p134 = scmp.eq.s32.totalorder %s14, 3
      %p135 = scmp.ne.s32.totalorder %s130, %s132
      %p136 = scmp.eq.s32.totalorder %s14, 0
      %p137 = por %p135, %p136
      %p138 = scmp.ne.s32.totalorder %s130, %s132
      %p139 = scmp.eq.s32.totalorder %s19, 3
      %p140 = por %p138, %p139
      %p141 = scmp.ne.s32.totalorder %s132, %s133
      %p142 = scmp.eq.s32.totalorder %s19, 0
      %p143 = por %p141, %p142
      %p144 = scmp.ne.s32.totalorder %s132, %s133
      %p145 = scmp.eq.s32.totalorder %s20, 3
      %p146 = por %p144, %p145
      %p148 = scmp.ne.s32.totalorder %s133, %s147
      %p149 = scmp.eq.s32.totalorder %s20, 0
      %p150 = por %p148, %p149
      %s152 = sadd.s32 %s151, 1
      %p155 = scmp.eq.s32.totalorder %s14, 3
      %p156 = scmp.ne.s32.totalorder %s151, %s153
      %p157 = scmp.eq.s32.totalorder %s14, 0
      %p158 = por %p156, %p157
      %p159 = scmp.ne.s32.totalorder %s151, %s153
      %p160 = scmp.eq.s32.totalorder %s19, 3
      %p161 = por %p159, %p160
      %p162 = scmp.ne.s32.totalorder %s153, %s154
      %p163 = scmp.eq.s32.totalorder %s19, 0
      %p164 = por %p162, %p163
      %p165 = scmp.ne.s32.totalorder %s153, %s154
      %p166 = scmp.eq.s32.totalorder %s20, 3
      %p167 = por %p165, %p166
      %p169 = scmp.ne.s32.totalorder %s154, %s168
      %p170 = scmp.eq.s32.totalorder %s20, 0
      %p171 = por %p169, %p170
      %s173 = sadd.s32 %s172, 1
      %p176 = scmp.eq.s32.totalorder %s14, 3
      %p177 = scmp.ne.s32.totalorder %s172, %s174
      %p178 = scmp.eq.s32.totalorder %s14, 0
      %p179 = por %p177, %p178
      %p180 = scmp.ne.s32.totalorder %s172, %s174
      %p181 = scmp.eq.s32.totalorder %s19, 3
      %p182 = por %p180, %p181
      %p183 = scmp.ne.s32.totalorder %s174, %s175
      %p184 = scmp.eq.s32.totalorder %s19, 0
      %p185 = por %p183, %p184
      %p186 = scmp.ne.s32.totalorder %s174, %s175
      %p187 = scmp.eq.s32.totalorder %s20, 3
      %p188 = por %p186, %p187
      %p190 = scmp.ne.s32.totalorder %s175, %s189
      %p191 = scmp.eq.s32.totalorder %s20, 0
      %p192 = por %p190, %p191
      %s194 = sadd.s32 %s193, 1
      %p197 = scmp.eq.s32.totalorder %s14, 3
      %p198 = scmp.ne.s32.totalorder %s193, %s195
      %p199 = scmp.eq.s32.totalorder %s14, 0
      %p200 = por %p198, %p199
      %p201 = scmp.ne.s32.totalorder %s193, %s195
      %p202 = scmp.eq.s32.totalorder %s19, 3
      %p203 = por %p201, %p202
      %p204 = scmp.ne.s32.totalorder %s195, %s196
      %p205 = scmp.eq.s32.totalorder %s19, 0
      %p206 = por %p204, %p205
      %p207 = scmp.ne.s32.totalorder %s195, %s196
      %p208 = scmp.eq.s32.totalorder %s20, 3
      %p209 = por %p207, %p208
      %p211 = scmp.ne.s32.totalorder %s196, %s210
      %p212 = scmp.eq.s32.totalorder %s20, 0
      %p213 = por %p211, %p212
      %s215 = sadd.s32 %s214, 1
      %p218 = scmp.eq.s32.totalorder %s14, 3
      %p219 = scmp.ne.s32.totalorder %s214, %s216
      %p220 = scmp.eq.s32.totalorder %s14, 0
      %p221 = por %p219, %p220
      %p222 = scmp.ne.s32.totalorder %s214, %s216
      %p223 = scmp.eq.s32.totalorder %s19, 3
      %p224 = por %p222, %p223
      %p225 = scmp.ne.s32.totalorder %s216, %s217
      %p226 = scmp.eq.s32.totalorder %s19, 0
      %p227 = por %p225, %p226
      %p228 = scmp.ne.s32.totalorder %s216, %s217
      %p229 = scmp.eq.s32.totalorder %s20, 3
      %p230 = por %p228, %p229
      %p232 = scmp.ne.s32.totalorder %s217, %s231
      %p233 = scmp.eq.s32.totalorder %s20, 0
      %p234 = por %p232, %p233
      %s235 = ssub.s32 %s21, %s33
      %s236 = ssub.s32 %s22, %s29
      %s237 = sor.u32 %s235, %s236
      %p238 = scmp.eq.s32.totalorder %s237, 0
      %s240 = sadd.s32 %s239, 1
      %s241 = scalar_select %p238, %s239, %s240
      %p244 = pneg %p238
      %p245 = scmp.eq.s32.totalorder %s14, 3
      %p246 = por %p244, %p245
      %p247 = scmp.ne.s32.totalorder %s239, %s242
      %p248 = scmp.eq.s32.totalorder %s14, 0
      %p249 = por %p247, %p248
      %p250 = scmp.ne.s32.totalorder %s239, %s242
      %p251 = scmp.eq.s32.totalorder %s19, 3
      %p252 = por %p250, %p251
      %p253 = scmp.ne.s32.totalorder %s242, %s243
      %p254 = scmp.eq.s32.totalorder %s19, 0
      %p255 = por %p253, %p254
      %p256 = scmp.ne.s32.totalorder %s242, %s243
      %p257 = scmp.eq.s32.totalorder %s20, 3
      %p258 = por %p256, %p257
      %p260 = scmp.ne.s32.totalorder %s243, %s259
      %p261 = scmp.eq.s32.totalorder %s20, 0
      %p262 = por %p260, %p261
      %p263 = scmp.le.s32.totalorder 1, %s14
      %p264 = scmp.lt.s32.totalorder %s14, 5
      %p265 = pnand %p263, %p264
      %p266 = pneg %p265
      // Predicated region
      $region9: #{norm_mlp_forward.3} parent=5 // pred_check
        _
      $region10: #{norm_mlp_forward.3} parent=5 // pred_check_branch
        %268 = sbr.rel (%p265) target = $region12
      $region11: #{norm_mlp_forward.3} parent=5 // pred_region
        %s269 = ssub.s32 %s14, 1
        // Predicated region
        $region13: #{norm_mlp_forward.3} parent=11 // pred_check
          %p270 = pneg %p143
        $region14: #{norm_mlp_forward.3} parent=11 // pred_check_branch
          %272 = sbr.rel (%p270) target = $region16
        $region15: #{norm_mlp_forward.3} parent=11 // pred_region
          _
        $region16: #{norm_mlp_forward.3} parent=11 // pred_fallthru
          _
        // Predicated region
        $region17: #{norm_mlp_forward.3} parent=11 // pred_check
          %p273 = pneg %p164
        $region18: #{norm_mlp_forward.3} parent=11 // pred_check_branch
          %275 = sbr.rel (%p273) target = $region20
        $region19: #{norm_mlp_forward.3} parent=11 // pred_region
          _
        $region20: #{norm_mlp_forward.3} parent=11 // pred_fallthru
          _
        // Predicated region
        $region21: #{norm_mlp_forward.3} parent=11 // pred_check
          %p276 = pneg %p185
        $region22: #{norm_mlp_forward.3} parent=11 // pred_check_branch
          %278 = sbr.rel (%p276) target = $region24
        $region23: #{norm_mlp_forward.3} parent=11 // pred_region
          _
        $region24: #{norm_mlp_forward.3} parent=11 // pred_fallthru
          _
        // Predicated region
        $region25: #{norm_mlp_forward.3} parent=11 // pred_check
          %p279 = pneg %p206
        $region26: #{norm_mlp_forward.3} parent=11 // pred_check_branch
          %281 = sbr.rel (%p279) target = $region28
        $region27: #{norm_mlp_forward.3} parent=11 // pred_region
          _
        $region28: #{norm_mlp_forward.3} parent=11 // pred_fallthru
          _
        // Predicated region
        $region29: #{norm_mlp_forward.3} parent=11 // pred_check
          %p282 = pneg %p227
        $region30: #{norm_mlp_forward.3} parent=11 // pred_check_branch
          %284 = sbr.rel (%p282) target = $region32
        $region31: #{norm_mlp_forward.3} parent=11 // pred_region
          _
        $region32: #{norm_mlp_forward.3} parent=11 // pred_fallthru
          _
      $region12: #{norm_mlp_forward.3} parent=5 // pred_fallthru
        _
      %p285 = scmp.lt.s32.totalorder %s14, 4
      // Predicated region
      $region33: #{norm_mlp_forward.3} parent=5 // pred_check
        %p286 = pneg %p285
      $region34: #{norm_mlp_forward.3} parent=5 // pred_check_branch
        %288 = sbr.rel (%p286) target = $region36
      $region35: #{norm_mlp_forward.3} parent=5 // pred_region
        // Predicated region
        $region37: #{norm_mlp_forward.3} parent=35 // pred_check
          %p289 = pneg %p48
        $region38: #{norm_mlp_forward.3} parent=35 // pred_check_branch
          %291 = sbr.rel (%p289) target = $region40
        $region39: #{norm_mlp_forward.3} parent=35 // pred_region
          %p292 = scmp.lt.s32.totalorder %s21, 1
          %s293 = scalar_select %p292, %s21, 1
          %p294 = scmp.lt.s32.totalorder %s22, 1
          %s295 = scalar_select %p294, %s22, 1
          %s296 = smul.addr %s293, 2
          %s297 = sadd.s32 %s295, %s296
          %s298 = smul.addr %s297, 8
          %s299 = scalar_lea.vmem %s0, %s298
        $region40: #{norm_mlp_forward.3} parent=35 // pred_fallthru
          _
        // Predicated region
        $region41: #{norm_mlp_forward.3} parent=35 // pred_check
          %p300 = pneg %p82
        $region42: #{norm_mlp_forward.3} parent=35 // pred_check_branch
          %302 = sbr.rel (%p300) target = $region44
        $region43: #{norm_mlp_forward.3} parent=35 // pred_region
          %s303 = sand.u32 %s72, 1
          %s304 = sand.u32 %s72, 1
          %s305 = smul.addr %s304, 64
          %s306 = scalar_lea.vmem [#allocation3], %s305
          %s307 = ssub.s32 %s22, 1
          %p308 = scmp.gt.s32.totalorder %s307, 0
          %s309 = scalar_select %p308, %s307, 0
          %s310 = smul.addr %s21, 16
          %s311 = sadd.s32 %s309, %s310
          %s312 = smul.addr %s311, 8
          %s313 = scalar_lea.vmem %s1, %s312
          // Predicated region
          $region45: #{norm_mlp_forward.3} parent=43 // pred_check
            _
          $region46: #{norm_mlp_forward.3} parent=43 // pred_check_branch
            %315 = sbr.rel (0) target = $region48
          $region47: #{norm_mlp_forward.3} parent=43 // pred_region
            // Predicated region
            $region49: #{norm_mlp_forward.3} parent=47 // pred_check
              _
            $region50: #{norm_mlp_forward.3} parent=47 // pred_check_branch
              %317 = sbr.rel (0) target = $region52
            $region51: #{norm_mlp_forward.3} parent=47 // pred_region
              // Predicated region
              $region64: #{norm_mlp_forward.3} parent=51 // pred_check
                _
              $region65: #{norm_mlp_forward.3} parent=51 // pred_check_branch
                %347 = sbr.rel (0) target = $region67
              $region66: #{norm_mlp_forward.3} parent=51 // pred_region
                loop: start=0, step=1, limit=1
                $region68: #{norm_mlp_forward.3} parent=66 // loop_pre_header
                  _
                $region69: #{norm_mlp_forward.3} parent=66 // loop_header
                  %s349 = sphi 0, %s353
                  %p350 = scmp.ge.s32.totalorder %s349, 1
                  %s354 = sphi %s313, %s313
                  %s355 = sphi %s306, %s306
                $region70: #{norm_mlp_forward.3} parent=66 // loop_header_branch
                  %352 = sbr.rel (%p350) target = $region74
                $region71: #{norm_mlp_forward.3} parent=66 // loop_body
                  %v356 = vld [vmem:[%s354] sm:$0xff]
                  %357 = vst [vmem:[%s355] sm:$0xff] %v356
                  %v358 = vld [vmem:[%s354 + $0x10] sm:$0xff]
                  %359 = vst [vmem:[%s355 + $0x8] sm:$0xff] %v358
                  %v360 = vld [vmem:[%s354 + $0x20] sm:$0xff]
                  %361 = vst [vmem:[%s355 + $0x10] sm:$0xff] %v360
                  %v362 = vld [vmem:[%s354 + $0x30] sm:$0xff]
                  %363 = vst [vmem:[%s355 + $0x18] sm:$0xff] %v362
                  %v364 = vld [vmem:[%s354 + $0x40] sm:$0xff]
                  %365 = vst [vmem:[%s355 + $0x20] sm:$0xff] %v364
                  %v366 = vld [vmem:[%s354 + $0x50] sm:$0xff]
                  %367 = vst [vmem:[%s355 + $0x28] sm:$0xff] %v366
                  %v368 = vld [vmem:[%s354 + $0x60] sm:$0xff]
                  %369 = vst [vmem:[%s355 + $0x30] sm:$0xff] %v368
                  %v370 = vld [vmem:[%s354 + $0x70] sm:$0xff]
                  %371 = vst [vmem:[%s355 + $0x38] sm:$0xff] %v370
                $region72: #{norm_mlp_forward.3} parent=66 // loop_footer
                  %s353 = sadd.s32 1, %s349
                $region73: #{norm_mlp_forward.3} parent=66 // loop_footer_branch
                  %348 = sbr.rel target = $region69
                $region74: #{norm_mlp_forward.3} parent=66 // loop_exit
                  _
              $region67: #{norm_mlp_forward.3} parent=51 // pred_fallthru
                _
              // Predicated region
              $region75: #{norm_mlp_forward.3} parent=51 // pred_check
                _
              $region76: #{norm_mlp_forward.3} parent=51 // pred_check_branch
                %373 = sbr.rel target = $region78
              $region77: #{norm_mlp_forward.3} parent=51 // pred_region
                _
              $region78: #{norm_mlp_forward.3} parent=51 // pred_fallthru
                _
            $region52: #{norm_mlp_forward.3} parent=47 // pred_fallthru
              _
            // Predicated region
            $region53: #{norm_mlp_forward.3} parent=47 // pred_check
              _
            $region54: #{norm_mlp_forward.3} parent=47 // pred_check_branch
              %319 = sbr.rel target = $region56
            $region55: #{norm_mlp_forward.3} parent=47 // pred_region
              %s321 = ssub.s32 256, 1
              loop: start=0, step=1, limit=1
              $region57: #{norm_mlp_forward.3} parent=55 // loop_pre_header
                _
              $region58: #{norm_mlp_forward.3} parent=55 // loop_header
                %s323 = sphi 0, %s327
                %p324 = scmp.ge.s32.totalorder %s323, 1
                %s328 = sphi %s313, %s313
                %s329 = sphi %s306, %s306
              $region59: #{norm_mlp_forward.3} parent=55 // loop_header_branch
                %326 = sbr.rel (%p324) target = $region63
              $region60: #{norm_mlp_forward.3} parent=55 // loop_body
                %v330 = vld [vmem:[%s328] sm:%s321]
                %331 = vst [vmem:[%s329] sm:%s321] %v330
                %v332 = vld [vmem:[%s328 + $0x10] sm:%s321]
                %333 = vst [vmem:[%s329 + $0x8] sm:%s321] %v332
                %v334 = vld [vmem:[%s328 + $0x20] sm:%s321]
                %335 = vst [vmem:[%s329 + $0x10] sm:%s321] %v334
                %v336 = vld [vmem:[%s328 + $0x30] sm:%s321]
                %337 = vst [vmem:[%s329 + $0x18] sm:%s321] %v336
                %v338 = vld [vmem:[%s328 + $0x40] sm:%s321]
                %339 = vst [vmem:[%s329 + $0x20] sm:%s321] %v338
                %v340 = vld [vmem:[%s328 + $0x50] sm:%s321]
                %341 = vst [vmem:[%s329 + $0x28] sm:%s321] %v340
                %v342 = vld [vmem:[%s328 + $0x60] sm:%s321]
                %343 = vst [vmem:[%s329 + $0x30] sm:%s321] %v342
                %v344 = vld [vmem:[%s328 + $0x70] sm:%s321]
                %345 = vst [vmem:[%s329 + $0x38] sm:%s321] %v344
              $region61: #{norm_mlp_forward.3} parent=55 // loop_footer
                %s327 = sadd.s32 1, %s323
              $region62: #{norm_mlp_forward.3} parent=55 // loop_footer_branch
                %322 = sbr.rel target = $region58
              $region63: #{norm_mlp_forward.3} parent=55 // loop_exit
                _
            $region56: #{norm_mlp_forward.3} parent=47 // pred_fallthru
              _
          $region48: #{norm_mlp_forward.3} parent=43 // pred_fallthru
            _
          %374 = vnop
        $region44: #{norm_mlp_forward.3} parent=35 // pred_fallthru
          _
        // Predicated region
        $region79: #{norm_mlp_forward.3} parent=35 // pred_check
          %p375 = pneg %p116
        $region80: #{norm_mlp_forward.3} parent=35 // pred_check_branch
          %377 = sbr.rel (%p375) target = $region82
        $region81: #{norm_mlp_forward.3} parent=35 // pred_region
          %s378 = sand.u32 %s106, 1
          %s379 = sand.u32 %s106, 1
          %s380 = smul.addr %s379, 64
          %s381 = scalar_lea.vmem [#allocation4], %s380
          %s382 = sadd.s32 %s22, 1
          %p383 = scmp.lt.s32.totalorder %s382, 1
          %s384 = scalar_select %p383, %s382, 1
          %s385 = smul.addr %s21, 16
          %s386 = sadd.s32 %s384, %s385
          %s387 = smul.addr %s386, 8
          %s388 = scalar_lea.vmem %s2, %s387
          // Predicated region
          $region83: #{norm_mlp_forward.3} parent=81 // pred_check
            _
          $region84: #{norm_mlp_forward.3} parent=81 // pred_check_branch
            %390 = sbr.rel (0) target = $region86
          $region85: #{norm_mlp_forward.3} parent=81 // pred_region
            // Predicated region
            $region87: #{norm_mlp_forward.3} parent=85 // pred_check
              _
            $region88: #{norm_mlp_forward.3} parent=85 // pred_check_branch
              %392 = sbr.rel (0) target = $region90
            $region89: #{norm_mlp_forward.3} parent=85 // pred_region
              // Predicated region
              $region102: #{norm_mlp_forward.3} parent=89 // pred_check
                _
              $region103: #{norm_mlp_forward.3} parent=89 // pred_check_branch
                %422 = sbr.rel (0) target = $region105
              $region104: #{norm_mlp_forward.3} parent=89 // pred_region
                loop: start=0, step=1, limit=1
                $region106: #{norm_mlp_forward.3} parent=104 // loop_pre_header
                  _
                $region107: #{norm_mlp_forward.3} parent=104 // loop_header
                  %s424 = sphi 0, %s428
                  %p425 = scmp.ge.s32.totalorder %s424, 1
                  %s429 = sphi %s388, %s388
                  %s430 = sphi %s381, %s381
                $region108: #{norm_mlp_forward.3} parent=104 // loop_header_branch
                  %427 = sbr.rel (%p425) target = $region112
                $region109: #{norm_mlp_forward.3} parent=104 // loop_body
                  %v431 = vld [vmem:[%s429] sm:$0xff]
                  %432 = vst [vmem:[%s430] sm:$0xff] %v431
                  %v433 = vld [vmem:[%s429 + $0x10] sm:$0xff]
                  %434 = vst [vmem:[%s430 + $0x8] sm:$0xff] %v433
                  %v435 = vld [vmem:[%s429 + $0x20] sm:$0xff]
                  %436 = vst [vmem:[%s430 + $0x10] sm:$0xff] %v435
                  %v437 = vld [vmem:[%s429 + $0x30] sm:$0xff]
                  %438 = vst [vmem:[%s430 + $0x18] sm:$0xff] %v437
                  %v439 = vld [vmem:[%s429 + $0x40] sm:$0xff]
                  %440 = vst [vmem:[%s430 + $0x20] sm:$0xff] %v439
                  %v441 = vld [vmem:[%s429 + $0x50] sm:$0xff]
                  %442 = vst [vmem:[%s430 + $0x28] sm:$0xff] %v441
                  %v443 = vld [vmem:[%s429 + $0x60] sm:$0xff]
                  %444 = vst [vmem:[%s430 + $0x30] sm:$0xff] %v443
                  %v445 = vld [vmem:[%s429 + $0x70] sm:$0xff]
                  %446 = vst [vmem:[%s430 + $0x38] sm:$0xff] %v445
                $region110: #{norm_mlp_forward.3} parent=104 // loop_footer
                  %s428 = sadd.s32 1, %s424
                $region111: #{norm_mlp_forward.3} parent=104 // loop_footer_branch
                  %423 = sbr.rel target = $region107
                $region112: #{norm_mlp_forward.3} parent=104 // loop_exit
                  _
              $region105: #{norm_mlp_forward.3} parent=89 // pred_fallthru
                _
              // Predicated region
              $region113: #{norm_mlp_forward.3} parent=89 // pred_check
                _
              $region114: #{norm_mlp_forward.3} parent=89 // pred_check_branch
                %448 = sbr.rel target = $region116
              $region115: #{norm_mlp_forward.3} parent=89 // pred_region
                _
              $region116: #{norm_mlp_forward.3} parent=89 // pred_fallthru
                _
            $region90: #{norm_mlp_forward.3} parent=85 // pred_fallthru
              _
            // Predicated region
            $region91: #{norm_mlp_forward.3} parent=85 // pred_check
              _
            $region92: #{norm_mlp_forward.3} parent=85 // pred_check_branch
              %394 = sbr.rel target = $region94
            $region93: #{norm_mlp_forward.3} parent=85 // pred_region
              %s396 = ssub.s32 256, 1
              loop: start=0, step=1, limit=1
              $region95: #{norm_mlp_forward.3} parent=93 // loop_pre_header
                _
              $region96: #{norm_mlp_forward.3} parent=93 // loop_header
                %s398 = sphi 0, %s402
                %p399 = scmp.ge.s32.totalorder %s398, 1
                %s403 = sphi %s388, %s388
                %s404 = sphi %s381, %s381
              $region97: #{norm_mlp_forward.3} parent=93 // loop_header_branch
                %401 = sbr.rel (%p399) target = $region101
              $region98: #{norm_mlp_forward.3} parent=93 // loop_body
                %v405 = vld [vmem:[%s403] sm:%s396]
                %406 = vst [vmem:[%s404] sm:%s396] %v405
                %v407 = vld [vmem:[%s403 + $0x10] sm:%s396]
                %408 = vst [vmem:[%s404 + $0x8] sm:%s396] %v407
                %v409 = vld [vmem:[%s403 + $0x20] sm:%s396]
                %410 = vst [vmem:[%s404 + $0x10] sm:%s396] %v409
                %v411 = vld [vmem:[%s403 + $0x30] sm:%s396]
                %412 = vst [vmem:[%s404 + $0x18] sm:%s396] %v411
                %v413 = vld [vmem:[%s403 + $0x40] sm:%s396]
                %414 = vst [vmem:[%s404 + $0x20] sm:%s396] %v413
                %v415 = vld [vmem:[%s403 + $0x50] sm:%s396]
                %416 = vst [vmem:[%s404 + $0x28] sm:%s396] %v415
                %v417 = vld [vmem:[%s403 + $0x60] sm:%s396]
                %418 = vst [vmem:[%s404 + $0x30] sm:%s396] %v417
                %v419 = vld [vmem:[%s403 + $0x70] sm:%s396]
                %420 = vst [vmem:[%s404 + $0x38] sm:%s396] %v419
              $region99: #{norm_mlp_forward.3} parent=93 // loop_footer
                %s402 = sadd.s32 1, %s398
              $region100: #{norm_mlp_forward.3} parent=93 // loop_footer_branch
                %397 = sbr.rel target = $region96
              $region101: #{norm_mlp_forward.3} parent=93 // loop_exit
                _
            $region94: #{norm_mlp_forward.3} parent=85 // pred_fallthru
              _
          $region86: #{norm_mlp_forward.3} parent=81 // pred_fallthru
            _
          %449 = vnop
        $region82: #{norm_mlp_forward.3} parent=35 // pred_fallthru
          _
      $region36: #{norm_mlp_forward.3} parent=5 // pred_fallthru
        _
      %p450 = scmp.le.s32.totalorder 1, %s14
      %p451 = scmp.lt.s32.totalorder %s14, 5
      %p452 = pnand %p450, %p451
      %p453 = pneg %p452
      // Predicated region
      $region117: #{norm_mlp_forward.3} parent=5 // pred_check
        _
      $region118: #{norm_mlp_forward.3} parent=5 // pred_check_branch
        %455 = sbr.rel (%p452) target = $region120
      $region119: #{norm_mlp_forward.3} parent=5 // pred_region
        %s456 = ssub.s32 %s14, 1
        %s457 = sand.u32 %s75, 1
        %s458 = sand.u32 %s75, 1
        %s459 = smul.addr %s458, 64
        %s460 = scalar_lea.vmem [#allocation3], %s459
        // Predicated region
        $region121: #{norm_mlp_forward.3} parent=119 // pred_check
          %p461 = pneg %p88
        $region122: #{norm_mlp_forward.3} parent=119 // pred_check_branch
          %463 = sbr.rel (%p461) target = $region124
        $region123: #{norm_mlp_forward.3} parent=119 // pred_region
          _
        $region124: #{norm_mlp_forward.3} parent=119 // pred_fallthru
          _
        %s464 = sand.u32 %s109, 1
        %s465 = sand.u32 %s109, 1
        %s466 = smul.addr %s465, 64
        %s467 = scalar_lea.vmem [#allocation4], %s466
        // Predicated region
        $region125: #{norm_mlp_forward.3} parent=119 // pred_check
          %p468 = pneg %p122
        $region126: #{norm_mlp_forward.3} parent=119 // pred_check_branch
          %470 = sbr.rel (%p468) target = $region128
        $region127: #{norm_mlp_forward.3} parent=119 // pred_region
          _
        $region128: #{norm_mlp_forward.3} parent=119 // pred_fallthru
          _
        %p471 = scmp.lt.s32.totalorder %s23, 1
        %s472 = scalar_select %p471, %s23, 1
        %p473 = scmp.lt.s32.totalorder %s24, 1
        %s474 = scalar_select %p473, %s24, 1
        %s475 = smul.addr %s472, 2
        %s476 = sadd.s32 %s474, %s475
        %s477 = smul.addr %s476, 8
        %s478 = scalar_lea.vmem %s0, %s477
        %p479 = pneg %p54
        %p480 = pneg %p51
        %s481 = sand.u32 %s75, 1
        %s482 = sand.u32 %s75, 1
        %s483 = smul.addr %s482, 64
        %s484 = scalar_lea.vmem [#allocation3], %s483
        %p485 = pneg %p88
        %p486 = pneg %p85
        %s487 = sand.u32 %s109, 1
        %s488 = sand.u32 %s109, 1
        %s489 = smul.addr %s488, 64
        %s490 = scalar_lea.vmem [#allocation4], %s489
        %p491 = pneg %p122
        %p492 = pneg %p119
        %p493 = pneg %p143
        %p494 = pneg %p140
        %p495 = pneg %p164
        %p496 = pneg %p161
        %p497 = pneg %p185
        %p498 = pneg %p182
        %p499 = pneg %p206
        %p500 = pneg %p203
        %p501 = pneg %p227
        %p502 = pneg %p224
        %p503 = pneg %p255
        %p504 = pneg %p252
        %p505 = scmp.lt.s32.totalorder %s23, 1
        %s506 = scalar_select %p505, %s23, 1
        %p507 = scmp.lt.s32.totalorder %s24, 1
        %s508 = scalar_select %p507, %s24, 1
        %s509 = smul.addr %s506, 2
        %s510 = sadd.s32 %s508, %s509
        %s511 = smul.addr %s510, 8
        %s512 = scalar_lea.vmem %s8, %s511
        %p513 = scmp.lt.s32.totalorder %s23, 1
        %s514 = scalar_select %p513, %s23, 1
        %p515 = scmp.lt.s32.totalorder %s24, 1
        %s516 = scalar_select %p515, %s24, 1
        %s517 = smul.addr %s514, 2
        %s518 = sadd.s32 %s516, %s517
        %s519 = smul.addr %s518, 8
        %s520 = scalar_lea.vmem %s0, %s519
        %s521 = ssub.s32 %s24, 1
        %p522 = scmp.gt.s32.totalorder %s521, 0
        %s523 = scalar_select %p522, %s521, 0
        %s524 = sadd.s32 %s24, 1
        %p525 = scmp.lt.s32.totalorder %s524, 1
        %s526 = scalar_select %p525, %s524, 1
        %p527 = scmp.lt.s32.totalorder %s23, 1
        %s528 = scalar_select %p527, %s23, 1
        %p529 = scmp.lt.s32.totalorder %s24, 1
        %s530 = scalar_select %p529, %s24, 1
        %s531 = smul.addr %s528, 2
        %s532 = sadd.s32 %s530, %s531
        %s533 = smul.addr %s532, 8
        %s534 = scalar_lea.vmem %s8, %s533
        %v535 = vld [vmem:[%s3] sm:$0xff]
        %v536 = vld [vmem:[%s3 + $0x8] sm:$0xff]
        %v537 = vld [vmem:[%s520] sm:$0xff]
        %vm538 = vcmask 64512
        %v540 = vsel %vm538, %v535, 0
        %v543 = vsel %vm538, %v536, 0
        %545 = vmatprep.subr.mxu0 0.0
        %546 = vmatpush1.msra.mxu0 0.0
        %547 = vmatprep.subr.mxu0 0.0
        %548 = vmatpush1.msra.mxu0 0.0
        %549 = vmatprep.subr.mxu0 0.0
        %550 = vmatpush1.msra.mxu0 0.0
        %551 = vmatprep.subr.mxu0 0.0
        %552 = vmatpush1.msra.mxu0 0.0
        %553 = vmatprep.subr.mxu0 0.0
        %554 = vmatpush1.msra.mxu0 0.0
        %555 = vmatprep.subr.mxu0 0.0
        %556 = vmatpush1.msra.mxu0 0.0
        %557 = vmatprep.subr.mxu0 0.0
        %558 = vmatpush1.msra.mxu0 0.0
        %559 = vmatprep.subr.mxu0 0.0
        %560 = vmatpush1.msra.mxu0 0.0
        %561 = vmatprep.subr.mxu0 0.0
        %562 = vmatpush1.msra.mxu0 0.0
        %563 = vmatprep.subr.mxu0 0.0
        %564 = vmatpush1.msra.mxu0 0.0
        %565 = vmatprep.subr.mxu0 0.0
        %566 = vmatpush1.msra.mxu0 0.0
        %567 = vmatprep.subr.mxu0 0.0
        %568 = vmatpush1.msra.mxu0 0.0
        %569 = vmatprep.subr.mxu0 0.0
        %570 = vmatpush1.msra.mxu0 0.0
        %571 = vmatprep.subr.mxu0 0.0
        %572 = vmatpush1.msra.mxu0 0.0
        %573 = vmatprep.subr.mxu0 0.0
        %574 = vmatpush1.msra.mxu0 0.0
        %575 = vmatprep.subr.mxu0 0.0
        %576 = vmatpush1.msra.mxu0 %v537
        %577 = vmatprep.subr.mxu0 0.0
        %578 = vmatpush2.msra.mxu0 0.0
        %579 = vmatprep.subr.mxu0 0.0
        %580 = vmatpush2.msra.mxu0 0.0
        %581 = vmatprep.subr.mxu0 0.0
        %582 = vmatpush2.msra.mxu0 0.0
        %583 = vmatprep.subr.mxu0 0.0
        %584 = vmatpush2.msra.mxu0 0.0
        %585 = vmatprep.subr.mxu0 0.0
        %586 = vmatpush2.msra.mxu0 0.0
        %587 = vmatprep.subr.mxu0 0.0
        %588 = vmatpush2.msra.mxu0 0.0
        %589 = vmatprep.subr.mxu0 0.0
        %590 = vmatpush2.msra.mxu0 0.0
        %591 = vmatprep.subr.mxu0 0.0
        %592 = vmatpush2.msra.mxu0 0.0
        %593 = vmatprep.subr.mxu0 0.0
        %594 = vmatpush2.msra.mxu0 0.0
        %595 = vmatprep.subr.mxu0 0.0
        %596 = vmatpush2.msra.mxu0 0.0
        %597 = vmatprep.subr.mxu0 0.0
        %598 = vmatpush2.msra.mxu0 0.0
        %599 = vmatprep.subr.mxu0 0.0
        %600 = vmatpush2.msra.mxu0 0.0
        %601 = vmatprep.subr.mxu0 0.0
        %602 = vmatpush2.msra.mxu0 0.0
        %603 = vmatprep.subr.mxu0 0.0
        %604 = vmatpush2.msra.mxu0 0.0
        %605 = vmatprep.subr.mxu0 0.0
        %606 = vmatpush2.msra.mxu0 0.0
        %607 = vmatprep.subr.mxu0 0.0
        %608 = vmatpush2.msra.mxu0 0.0
        %609 = vmatprep.mubr.f32.mxu0 0.0
        %610 = vmatmul.mubr.f32.gmra.mxu0 %v540
        %v611 = vpop.f32.mrf.mxu0
        %v612 = vadd.f32 0.0, %v611
        %v613 = vpop.f32.mrf.mxu0
        %614 = vmatprep.mubr.f32.mxu0 0.0
        %615 = vmatmul.mubr.f32.gmra.mxu0 %v543
        %v616 = vpop.f32.mrf.mxu0
        %v617 = vadd.f32 0.0, %v616
        %v618 = vpop.f32.mrf.mxu0
        %619 = vdwg.mxu0
        %v620 = vmul.f32 %v612, 0.70710677
        %v621 = vmul.f32 %v617, 0.70710677
        %v622 = vand.u32 2147483647, %v620
        %v623 = vand.u32 2147483647, %v621
        %v624 = vmul.f32 %v622, 0.3275911
        %v625 = vmul.f32 %v623, 0.3275911
        %v626 = vadd.f32 %v624, 1.0
        %v627 = vadd.f32 %v625, 1.0
        %v628 = vrcp.pop %v626
        %v629 = vrcp.pop %v627
        %v630 = vmul.f32 %v628, 1.0614054
        %v631 = vmul.f32 %v629, 1.0614054
        %v632 = vadd.f32 %v630, -1.4531521
        %v633 = vadd.f32 %v631, -1.4531521
        %v634 = vmul.f32 %v628, %v632
        %v635 = vmul.f32 %v629, %v633
        %v636 = vadd.f32 %v634, 1.4214138
        %v637 = vadd.f32 %v635, 1.4214138
        %v638 = vmul.f32 %v628, %v636
        %v639 = vmul.f32 %v629, %v637
        %v640 = vadd.f32 %v638, -0.28449672
        %v641 = vadd.f32 %v639, -0.28449672
        %v642 = vmul.f32 %v628, %v640
        %v643 = vmul.f32 %v629, %v641
        %v644 = vadd.f32 %v642, 0.2548296
        %v645 = vadd.f32 %v643, 0.2548296
        %v646 = vmul.f32 %v628, %v644
        %v647 = vmul.f32 %v629, %v645
        %v648 = vsub.f32 0.0, %v622
        %v649 = vsub.f32 0.0, %v623
        %v650 = vmul.f32 %v648, %v622
        %v651 = vmul.f32 %v649, %v623
        %v652 = vmul.f32 %v650, 1.442695
        %v653 = vpow.pop %v652
        %v654 = vmul.f32 %v651, 1.442695
        %v655 = vpow.pop %v654
        %v656 = vmul.f32 %v646, %v653
        %v657 = vmul.f32 %v647, %v655
        %v658 = vsub.f32 1.0, %v656
        %v659 = vsub.f32 1.0, %v657
        %vm660 = vcmp.lt.f32.partialorder %v620, 0.0
        %vm661 = vcmp.lt.f32.partialorder %v621, 0.0
        %v662 = vsub.f32 0.0, %v658
        %v663 = vsub.f32 0.0, %v659
        %v664 = vsel %vm660, %v662, %v658
        %v665 = vsel %vm661, %v663, %v659
        %v666 = vmul.f32 %v612, 0.5
        %v667 = vmul.f32 %v617, 0.5
        %v668 = vadd.f32 %v664, 1.0
        %v669 = vadd.f32 %v665, 1.0
        %v670 = vmul.f32 %v666, %v668
        %v671 = vmul.f32 %v667, %v669
        %v672 = vld [vmem:[%s460] sm:$0xff]
        %v673 = vld [vmem:[%s460 + $0x8] sm:$0xff]
        %v674 = vld [vmem:[%s460 + $0x10] sm:$0xff]
        %v675 = vld [vmem:[%s460 + $0x18] sm:$0xff]
        %v676 = vld [vmem:[%s460 + $0x20] sm:$0xff]
        %v677 = vld [vmem:[%s460 + $0x28] sm:$0xff]
        %v678 = vld [vmem:[%s460 + $0x30] sm:$0xff]
        %v679 = vld [vmem:[%s460 + $0x38] sm:$0xff]
        %v680 = vld [vmem:[%s467] sm:$0xff]
        %v681 = vld [vmem:[%s467 + $0x8] sm:$0xff]
        %v682 = vld [vmem:[%s467 + $0x10] sm:$0xff]
        %v683 = vld [vmem:[%s467 + $0x18] sm:$0xff]
        %v684 = vld [vmem:[%s467 + $0x20] sm:$0xff]
        %v685 = vld [vmem:[%s467 + $0x28] sm:$0xff]
        %v686 = vld [vmem:[%s467 + $0x30] sm:$0xff]
        %v687 = vld [vmem:[%s467 + $0x38] sm:$0xff]
        %v696 = vrot.slane %v672, 7
        %v697 = vrot.slane %v673, 6
        %vm698 = vcmask 1041409
        %v699 = vsel %vm698, %v697, %v696
        %v700 = vrot.slane %v674, 5
        %vm701 = vcmask 1042434
        %v702 = vsel %vm701, %v700, %v699
        %v703 = vrot.slane %v675, 4
        %vm704 = vcmask 1043459
        %v705 = vsel %vm704, %v703, %v702
        %v706 = vrot.slane %v676, 3
        %vm707 = vcmask 1044484
        %v708 = vsel %vm707, %v706, %v705
        %v709 = vrot.slane %v677, 2
        %vm710 = vcmask 1045509
        %v711 = vsel %vm710, %v709, %v708
        %v712 = vrot.slane %v678, 1
        %vm713 = vcmask 1046534
        %v714 = vsel %vm713, %v712, %v711
        %vm715 = vcmask 1047559
        %v716 = vsel %vm715, %v679, %v714
        %718 = vmatprep.subr.mxu0 0.0
        %719 = vmatpush1.msra.mxu0 0.0
        %720 = vmatprep.subr.mxu0 0.0
        %721 = vmatpush1.msra.mxu0 0.0
        %722 = vmatprep.subr.mxu0 0.0
        %723 = vmatpush1.msra.mxu0 0.0
        %724 = vmatprep.subr.mxu0 0.0
        %725 = vmatpush1.msra.mxu0 0.0
        %726 = vmatprep.subr.mxu0 0.0
        %727 = vmatpush1.msra.mxu0 0.0
        %728 = vmatprep.subr.mxu0 0.0
        %729 = vmatpush1.msra.mxu0 0.0
        %730 = vmatprep.subr.mxu0 0.0
        %731 = vmatpush1.msra.mxu0 0.0
        %732 = vmatprep.subr.mxu0 0.0
        %733 = vmatpush1.msra.mxu0 0.0
        %734 = vmatprep.subr.mxu0 0.0
        %735 = vmatpush1.msra.mxu0 0.0
        %736 = vmatprep.subr.mxu0 0.0
        %737 = vmatpush1.msra.mxu0 0.0
        %738 = vmatprep.subr.mxu0 0.0
        %739 = vmatpush1.msra.mxu0 0.0
        %740 = vmatprep.subr.mxu0 0.0
        %741 = vmatpush1.msra.mxu0 0.0
        %742 = vmatprep.subr.mxu0 0.0
        %743 = vmatpush1.msra.mxu0 0.0
        %744 = vmatprep.subr.mxu0 0.0
        %745 = vmatpush1.msra.mxu0 0.0
        %746 = vmatprep.subr.mxu0 0.0
        %747 = vmatpush1.msra.mxu0 0.0
        %748 = vmatprep.subr.mxu0 0.0
        %749 = vmatpush1.msra.mxu0 %v716
        %750 = vmatprep.subr.mxu0 0.0
        %751 = vmatpush2.msra.mxu0 0.0
        %752 = vmatprep.subr.mxu0 0.0
        %753 = vmatpush2.msra.mxu0 0.0
        %754 = vmatprep.subr.mxu0 0.0
        %755 = vmatpush2.msra.mxu0 0.0
        %756 = vmatprep.subr.mxu0 0.0
        %757 = vmatpush2.msra.mxu0 0.0
        %758 = vmatprep.subr.mxu0 0.0
        %759 = vmatpush2.msra.mxu0 0.0
        %760 = vmatprep.subr.mxu0 0.0
        %761 = vmatpush2.msra.mxu0 0.0
        %762 = vmatprep.subr.mxu0 0.0
        %763 = vmatpush2.msra.mxu0 0.0
        %764 = vmatprep.subr.mxu0 0.0
        %765 = vmatpush2.msra.mxu0 0.0
        %766 = vmatprep.subr.mxu0 0.0
        %767 = vmatpush2.msra.mxu0 0.0
        %768 = vmatprep.subr.mxu0 0.0
        %769 = vmatpush2.msra.mxu0 0.0
        %770 = vmatprep.subr.mxu0 0.0
        %771 = vmatpush2.msra.mxu0 0.0
        %772 = vmatprep.subr.mxu0 0.0
        %773 = vmatpush2.msra.mxu0 0.0
        %774 = vmatprep.subr.mxu0 0.0
        %775 = vmatpush2.msra.mxu0 0.0
        %776 = vmatprep.subr.mxu0 0.0
        %777 = vmatpush2.msra.mxu0 0.0
        %778 = vmatprep.subr.mxu0 0.0
        %779 = vmatpush2.msra.mxu0 0.0
        %780 = vmatprep.subr.mxu0 0.0
        %781 = vmatpush2.msra.mxu0 0.0
        %782 = vmatprep.mubr.f32.mxu0 0.0
        %783 = vmatmul.mubr.f32.gmra.mxu0 %v540
        %v784 = vpop.f32.mrf.mxu0
        %v785 = vadd.f32 0.0, %v784
        %v786 = vpop.f32.mrf.mxu0
        %787 = vmatprep.mubr.f32.mxu0 0.0
        %788 = vmatmul.mubr.f32.gmra.mxu0 %v543
        %v789 = vpop.f32.mrf.mxu0
        %v790 = vadd.f32 0.0, %v789
        %v791 = vpop.f32.mrf.mxu0
        %792 = vdwg.mxu0
        %v793 = vmul.f32 %v785, 0.70710677
        %v794 = vmul.f32 %v790, 0.70710677
        %v795 = vand.u32 2147483647, %v793
        %v796 = vand.u32 2147483647, %v794
        %v797 = vmul.f32 %v795, 0.3275911
        %v798 = vmul.f32 %v796, 0.3275911
        %v799 = vadd.f32 %v797, 1.0
        %v800 = vadd.f32 %v798, 1.0
        %v801 = vrcp.pop %v799
        %v802 = vrcp.pop %v800
        %v803 = vmul.f32 %v801, 1.0614054
        %v804 = vmul.f32 %v802, 1.0614054
        %v805 = vadd.f32 %v803, -1.4531521
        %v806 = vadd.f32 %v804, -1.4531521
        %v807 = vmul.f32 %v801, %v805
        %v808 = vmul.f32 %v802, %v806
        %v809 = vadd.f32 %v807, 1.4214138
        %v810 = vadd.f32 %v808, 1.4214138
        %v811 = vmul.f32 %v801, %v809
        %v812 = vmul.f32 %v802, %v810
        %v813 = vadd.f32 %v811, -0.28449672
        %v814 = vadd.f32 %v812, -0.28449672
        %v815 = vmul.f32 %v801, %v813
        %v816 = vmul.f32 %v802, %v814
        %v817 = vadd.f32 %v815, 0.2548296
        %v818 = vadd.f32 %v816, 0.2548296
        %v819 = vmul.f32 %v801, %v817
        %v820 = vmul.f32 %v802, %v818
        %v821 = vsub.f32 0.0, %v795
        %v822 = vsub.f32 0.0, %v796
        %v823 = vmul.f32 %v821, %v795
        %v824 = vmul.f32 %v822, %v796
        %v825 = vmul.f32 %v823, 1.442695
        %v826 = vpow.pop %v825
        %v827 = vmul.f32 %v824, 1.442695
        %v828 = vpow.pop %v827
        %v829 = vmul.f32 %v819, %v826
        %v830 = vmul.f32 %v820, %v828
        %v831 = vsub.f32 1.0, %v829
        %v832 = vsub.f32 1.0, %v830
        %vm833 = vcmp.lt.f32.partialorder %v793, 0.0
        %vm834 = vcmp.lt.f32.partialorder %v794, 0.0
        %v835 = vsub.f32 0.0, %v831
        %v836 = vsub.f32 0.0, %v832
        %v837 = vsel %vm833, %v835, %v831
        %v838 = vsel %vm834, %v836, %v832
        %v839 = vmul.f32 %v785, 0.5
        %v840 = vmul.f32 %v790, 0.5
        %v841 = vadd.f32 %v837, 1.0
        %v842 = vadd.f32 %v838, 1.0
        %v843 = vmul.f32 %v839, %v841
        %v844 = vmul.f32 %v840, %v842
        %v853 = vrot.slane %v681, 7
        %v854 = vsel %vm698, %v853, %v680
        %v855 = vrot.slane %v682, 6
        %v856 = vsel %vm701, %v855, %v854
        %v857 = vrot.slane %v683, 5
        %v858 = vsel %vm704, %v857, %v856
        %v859 = vrot.slane %v684, 4
        %v860 = vsel %vm707, %v859, %v858
        %v861 = vrot.slane %v685, 3
        %v862 = vsel %vm710, %v861, %v860
        %v863 = vrot.slane %v686, 2
        %v864 = vsel %vm713, %v863, %v862
        %v865 = vrot.slane %v687, 1
        %v866 = vsel %vm715, %v865, %v864
        %868 = vmatprep.subr.mxu0 0.0
        %869 = vmatpush1.msra.mxu0 0.0
        %870 = vmatprep.subr.mxu0 0.0
        %871 = vmatpush1.msra.mxu0 0.0
        %872 = vmatprep.subr.mxu0 0.0
        %873 = vmatpush1.msra.mxu0 0.0
        %874 = vmatprep.subr.mxu0 0.0
        %875 = vmatpush1.msra.mxu0 0.0
        %876 = vmatprep.subr.mxu0 0.0
        %877 = vmatpush1.msra.mxu0 0.0
        %878 = vmatprep.subr.mxu0 0.0
        %879 = vmatpush1.msra.mxu0 0.0
        %880 = vmatprep.subr.mxu0 0.0
        %881 = vmatpush1.msra.mxu0 0.0
        %882 = vmatprep.subr.mxu0 0.0
        %883 = vmatpush1.msra.mxu0 0.0
        %884 = vmatprep.subr.mxu0 0.0
        %885 = vmatpush1.msra.mxu0 0.0
        %886 = vmatprep.subr.mxu0 0.0
        %887 = vmatpush1.msra.mxu0 0.0
        %888 = vmatprep.subr.mxu0 0.0
        %889 = vmatpush1.msra.mxu0 0.0
        %890 = vmatprep.subr.mxu0 0.0
        %891 = vmatpush1.msra.mxu0 0.0
        %892 = vmatprep.subr.mxu0 0.0
        %893 = vmatpush1.msra.mxu0 0.0
        %894 = vmatprep.subr.mxu0 0.0
        %895 = vmatpush1.msra.mxu0 0.0
        %896 = vmatprep.subr.mxu0 0.0
        %897 = vmatpush1.msra.mxu0 0.0
        %898 = vmatprep.subr.mxu0 0.0
        %899 = vmatpush1.msra.mxu0 %v866
        %900 = vmatprep.subr.mxu0 0.0
        %901 = vmatpush2.msra.mxu0 0.0
        %902 = vmatprep.subr.mxu0 0.0
        %903 = vmatpush2.msra.mxu0 0.0
        %904 = vmatprep.subr.mxu0 0.0
        %905 = vmatpush2.msra.mxu0 0.0
        %906 = vmatprep.subr.mxu0 0.0
        %907 = vmatpush2.msra.mxu0 0.0
        %908 = vmatprep.subr.mxu0 0.0
        %909 = vmatpush2.msra.mxu0 0.0
        %910 = vmatprep.subr.mxu0 0.0
        %911 = vmatpush2.msra.mxu0 0.0
        %912 = vmatprep.subr.mxu0 0.0
        %913 = vmatpush2.msra.mxu0 0.0
        %914 = vmatprep.subr.mxu0 0.0
        %915 = vmatpush2.msra.mxu0 0.0
        %916 = vmatprep.subr.mxu0 0.0
        %917 = vmatpush2.msra.mxu0 0.0
        %918 = vmatprep.subr.mxu0 0.0
        %919 = vmatpush2.msra.mxu0 0.0
        %920 = vmatprep.subr.mxu0 0.0
        %921 = vmatpush2.msra.mxu0 0.0
        %922 = vmatprep.subr.mxu0 0.0
        %923 = vmatpush2.msra.mxu0 0.0
        %924 = vmatprep.subr.mxu0 0.0
        %925 = vmatpush2.msra.mxu0 0.0
        %926 = vmatprep.subr.mxu0 0.0
        %927 = vmatpush2.msra.mxu0 0.0
        %928 = vmatprep.subr.mxu0 0.0
        %929 = vmatpush2.msra.mxu0 0.0
        %930 = vmatprep.subr.mxu0 0.0
        %931 = vmatpush2.msra.mxu0 0.0
        %932 = vmatprep.mubr.f32.mxu0 0.0
        %933 = vmatmul.mubr.f32.gmra.mxu0 %v540
        %v934 = vpop.f32.mrf.mxu0
        %v935 = vadd.f32 0.0, %v934
        %v936 = vpop.f32.mrf.mxu0
        %937 = vmatprep.mubr.f32.mxu0 0.0
        %938 = vmatmul.mubr.f32.gmra.mxu0 %v543
        %v939 = vpop.f32.mrf.mxu0
        %v940 = vadd.f32 0.0, %v939
        %v941 = vpop.f32.mrf.mxu0
        %942 = vdwg.mxu0
        %v943 = vmul.f32 %v935, 0.70710677
        %v944 = vmul.f32 %v940, 0.70710677
        %v945 = vand.u32 2147483647, %v943
        %v946 = vand.u32 2147483647, %v944
        %v947 = vmul.f32 %v945, 0.3275911
        %v948 = vmul.f32 %v946, 0.3275911
        %v949 = vadd.f32 %v947, 1.0
        %v950 = vadd.f32 %v948, 1.0
        %v951 = vrcp.pop %v949
        %v952 = vrcp.pop %v950
        %v953 = vmul.f32 %v951, 1.0614054
        %v954 = vmul.f32 %v952, 1.0614054
        %v955 = vadd.f32 %v953, -1.4531521
        %v956 = vadd.f32 %v954, -1.4531521
        %v957 = vmul.f32 %v951, %v955
        %v958 = vmul.f32 %v952, %v956
        %v959 = vadd.f32 %v957, 1.4214138
        %v960 = vadd.f32 %v958, 1.4214138
        %v961 = vmul.f32 %v951, %v959
        %v962 = vmul.f32 %v952, %v960
        %v963 = vadd.f32 %v961, -0.28449672
        %v964 = vadd.f32 %v962, -0.28449672
        %v965 = vmul.f32 %v951, %v963
        %v966 = vmul.f32 %v952, %v964
        %v967 = vadd.f32 %v965, 0.2548296
        %v968 = vadd.f32 %v966, 0.2548296
        %v969 = vmul.f32 %v951, %v967
        %v970 = vmul.f32 %v952, %v968
        %v971 = vsub.f32 0.0, %v945
        %v972 = vsub.f32 0.0, %v946
        %v973 = vmul.f32 %v971, %v945
        %v974 = vmul.f32 %v972, %v946
        %v975 = vmul.f32 %v973, 1.442695
        %v976 = vpow.pop %v975
        %v977 = vmul.f32 %v974, 1.442695
        %v978 = vpow.pop %v977
        %v979 = vmul.f32 %v969, %v976
        %v980 = vmul.f32 %v970, %v978
        %v981 = vsub.f32 1.0, %v979
        %v982 = vsub.f32 1.0, %v980
        %vm983 = vcmp.lt.f32.partialorder %v943, 0.0
        %vm984 = vcmp.lt.f32.partialorder %v944, 0.0
        %v985 = vsub.f32 0.0, %v981
        %v986 = vsub.f32 0.0, %v982
        %v987 = vsel %vm983, %v985, %v981
        %v988 = vsel %vm984, %v986, %v982
        %v989 = vmul.f32 %v935, 0.5
        %v990 = vmul.f32 %v940, 0.5
        %v991 = vadd.f32 %v987, 1.0
        %v992 = vadd.f32 %v988, 1.0
        %v993 = vmul.f32 %v989, %v991
        %v994 = vmul.f32 %v990, %v992
        %p995 = scmp.gt.s32.totalorder %s24, 0
        %s996 = scalar_select %p995, 1, 0
        %s997 = scvt.s32.f32 %s996
        %v998 = vstv %s997
        %v999 = vmul.f32 %v843, %v998
        %v1000 = vmul.f32 %v844, %v998
        %p1001 = scmp.lt.s32.totalorder %s24, 1
        %s1002 = scalar_select %p1001, 1, 0
        %s1003 = scvt.s32.f32 %s1002
        %v1004 = vstv %s1003
        %v1005 = vmul.f32 %v993, %v1004
        %v1006 = vmul.f32 %v994, %v1004
        %vm1007 = vcmask 916480
        %1008 = vst.msk [vmem:[#allocation2] sm:$0xff] %vm1007, 0.0
        %1009 = vst.msk [vmem:[#allocation2 + $0x18] sm:$0xff] %vm1007, 0.0
        %1012 = vrot.lane.b32.xlu0 %v999, 112
        %v1013 = vpop.permute.xlu0 %1012
        %1014 = vrot.lane.b32.xlu0 %v1000, 112
        %v1015 = vpop.permute.xlu0 %1014
        %vm1018 = vcmask 1048448
        %1019 = vst.msk [vmem:[#allocation2] sm:$0xff] %vm1018, %v1013
        %1020 = vst.msk [vmem:[#allocation2 + $0x18] sm:$0xff] %vm1018, %v1015
        %1021 = vst [vmem:[#allocation2 + $0x8] sm:$0xff] %v670
        %1022 = vst [vmem:[#allocation2 + $0x20] sm:$0xff] %v671
        %vm1023 = vcmask 130048
        %1024 = vst.msk [vmem:[#allocation2 + $0x10] sm:$0xff] %vm1023, %v1005
        %1025 = vst.msk [vmem:[#allocation2 + $0x28] sm:$0xff] %vm1023, %v1006
        %vm1026 = vcmask 1047680
        %1027 = vst.msk [vmem:[#allocation2 + $0x10] sm:$0xff] %vm1026, 0.0
        %1028 = vst.msk [vmem:[#allocation2 + $0x28] sm:$0xff] %vm1026, 0.0
        %v1029 = vld [vmem:[%s4] sm:$0xff]
        %v1030 = vld [vmem:[%s4 + $0x8] sm:$0xff]
        %v1031 = vld [vmem:[%s4 + $0x10] sm:$0xff]
        %v1032 = vld [vmem:[%s4 + $0x18] sm:$0xff]
        %v1033 = vld [vmem:[%s4 + $0x20] sm:$0xff]
        %v1034 = vld [vmem:[%s4 + $0x28] sm:$0xff]
        %v1035 = vld [vmem:[%s4 + $0x30] sm:$0xff]
        %v1036 = vld [vmem:[%s4 + $0x38] sm:$0xff]
        %v1037 = vld [vmem:[%s4 + $0x40] sm:$0xff]
        %v1038 = vld [vmem:[%s4 + $0x48] sm:$0xff]
        %v1039 = vld [vmem:[%s4 + $0x50] sm:$0xff]
        %v1040 = vld [vmem:[%s4 + $0x58] sm:$0xff]
        %v1041 = vld [vmem:[%s4 + $0x60] sm:$0xff]
        %v1042 = vld [vmem:[%s4 + $0x68] sm:$0xff]
        %v1043 = vld [vmem:[%s4 + $0x70] sm:$0xff]
        %v1044 = vld [vmem:[%s4 + $0x78] sm:$0xff]
        %v1045 = vld [vmem:[%s4 + $0x80] sm:$0xff]
        %v1046 = vld [vmem:[%s4 + $0x88] sm:$0xff]
        %1048 = vset.pattern.permute.xlu0 0
        %1049 = vperm.xlu0 %1048, %v1037
        %v1050 = vpop.permute.xlu0 %1049
        %1053 = vset.pattern.permute.xlu0 0
        %1054 = vperm.xlu0 %1053, %v1038
        %v1055 = vpop.permute.xlu0 %1054
        %v1057 = vmul.f32 %v1050, %v670
        %v1058 = vmul.f32 %v1055, %v671
        %v1059 = vld [vmem:[#allocation2] sm:$0xff]
        %v1060 = vld [vmem:[#allocation2 + $0x8] sm:$0xff]
        %v1061 = vld [vmem:[#allocation2 + $0x18] sm:$0xff]
        %v1062 = vld [vmem:[#allocation2 + $0x20] sm:$0xff]
        %1064 = vset.pattern.permute.xlu0 0
        %1065 = vperm.xlu0 %1064, %v1031
        %v1066 = vpop.permute.xlu0 %1065
        %1069 = vset.pattern.permute.xlu0 0
        %1070 = vperm.xlu0 %1069, %v1032
        %v1071 = vpop.permute.xlu0 %1070
        %v1073 = vmul.f32 %v1066, %v1059
        %v1074 = vmul.f32 %v1066, %v1060
        %v1075 = vmul.f32 %v1071, %v1061
        %v1076 = vmul.f32 %v1071, %v1062
        %1081 = vrot.lane.b32.xlu0 %v1073, 16
        %v1082 = vpop.permute.xlu0 %1081
        %1083 = vrot.lane.b32.xlu0 %v1074, 16
        %v1084 = vpop.permute.xlu0 %1083
        %1085 = vrot.lane.b32.xlu0 %v1075, 16
        %v1086 = vpop.permute.xlu0 %1085
        %1087 = vrot.lane.b32.xlu0 %v1076, 16
        %v1088 = vpop.permute.xlu0 %1087
        %v1089 = vsel %vm1023, %v1082, %v1084
        %v1090 = vsel %vm1023, %v1086, %v1088
        %v1093 = vadd.f32 %v1057, %v1089
        %v1094 = vadd.f32 %v1058, %v1090
        %v1095 = vld [vmem:[#allocation2 + $0x8] sm:$0xff]
        %v1096 = vld [vmem:[#allocation2 + $0x10] sm:$0xff]
        %v1097 = vld [vmem:[#allocation2 + $0x20] sm:$0xff]
        %v1098 = vld [vmem:[#allocation2 + $0x28] sm:$0xff]
        %1100 = vset.pattern.permute.xlu0 0
        %1101 = vperm.xlu0 %1100, %v1043
        %v1102 = vpop.permute.xlu0 %1101
        %1105 = vset.pattern.permute.xlu0 0
        %1106 = vperm.xlu0 %1105, %v1044
        %v1107 = vpop.permute.xlu0 %1106
        %v1109 = vmul.f32 %v1102, %v1095
        %v1110 = vmul.f32 %v1102, %v1096
        %v1111 = vmul.f32 %v1107, %v1097
        %v1112 = vmul.f32 %v1107, %v1098
        %1117 = vrot.lane.b32.xlu0 %v1109, 112
        %v1118 = vpop.permute.xlu0 %1117
        %1119 = vrot.lane.b32.xlu0 %v1110, 112
        %v1120 = vpop.permute.xlu0 %1119
        %1121 = vrot.lane.b32.xlu0 %v1111, 112
        %v1122 = vpop.permute.xlu0 %1121
        %1123 = vrot.lane.b32.xlu0 %v1112, 112
        %v1124 = vpop.permute.xlu0 %1123
        %v1125 = vsel %vm1007, %v1118, %v1120
        %v1126 = vsel %vm1007, %v1122, %v1124
        %v1129 = vadd.f32 %v1093, %v1125
        %v1130 = vadd.f32 %v1094, %v1126
        %1132 = vset.pattern.permute.xlu0 0
        %1133 = vperm.xlu0 %1132, %v1029
        %v1134 = vpop.permute.xlu0 %1133
        %1137 = vset.pattern.permute.xlu0 0
        %1138 = vperm.xlu0 %1137, %v1030
        %v1139 = vpop.permute.xlu0 %1138
        %v1141 = vmul.f32 %v1134, %v1059
        %v1142 = vmul.f32 %v1134, %v1060
        %v1143 = vmul.f32 %v1139, %v1061
        %v1144 = vmul.f32 %v1139, %v1062
        %1146 = vset.pattern.permute.xlu0 0
        %1147 = vperm.xlu0 %1146, %v1035
        %v1148 = vpop.permute.xlu0 %1147
        %1151 = vset.pattern.permute.xlu0 0
        %1152 = vperm.xlu0 %1151, %v1036
        %v1153 = vpop.permute.xlu0 %1152
        %v1155 = vmul.f32 %v1148, %v1059
        %v1156 = vmul.f32 %v1148, %v1060
        %v1157 = vmul.f32 %v1153, %v1061
        %v1158 = vmul.f32 %v1153, %v1062
        %1163 = vrot.lane.b32.xlu0 %v1155, 112
        %v1164 = vpop.permute.xlu0 %1163
        %1165 = vrot.lane.b32.xlu0 %v1156, 112
        %v1166 = vpop.permute.xlu0 %1165
        %1167 = vrot.lane.b32.xlu0 %v1157, 112
        %v1168 = vpop.permute.xlu0 %1167
        %1169 = vrot.lane.b32.xlu0 %v1158, 112
        %v1170 = vpop.permute.xlu0 %1169
        %v1171 = vsel %vm1007, %v1164, %v1166
        %v1172 = vsel %vm1007, %v1168, %v1170
        %v1177 = vadd.f32 %v1141, %v1171
        %v1178 = vadd.f32 %v1142, %v1166
        %v1179 = vadd.f32 %v1143, %v1172
        %v1180 = vadd.f32 %v1144, %v1170
        %1182 = vset.pattern.permute.xlu0 0
        %1183 = vperm.xlu0 %1182, %v1041
        %v1184 = vpop.permute.xlu0 %1183
        %1187 = vset.pattern.permute.xlu0 0
        %1188 = vperm.xlu0 %1187, %v1042
        %v1189 = vpop.permute.xlu0 %1188
        %v1191 = vmul.f32 %v1184, %v1095
        %v1192 = vmul.f32 %v1184, %v1096
        %v1193 = vmul.f32 %v1189, %v1097
        %v1194 = vmul.f32 %v1189, %v1098
        %1199 = vrot.lane.b32.xlu0 %v1191, 96
        %v1200 = vpop.permute.xlu0 %1199
        %1201 = vrot.lane.b32.xlu0 %v1192, 96
        %v1202 = vpop.permute.xlu0 %1201
        %1203 = vrot.lane.b32.xlu0 %v1193, 96
        %v1204 = vpop.permute.xlu0 %1203
        %1205 = vrot.lane.b32.xlu0 %v1194, 96
        %v1206 = vpop.permute.xlu0 %1205
        %vm1207 = vcmask 785408
        %v1208 = vsel %vm1207, %v1200, %v1202
        %v1209 = vsel %vm1207, %v1204, %v1206
        %v1214 = vadd.f32 %v1177, %v1200
        %v1215 = vadd.f32 %v1178, %v1208
        %v1216 = vadd.f32 %v1179, %v1204
        %v1217 = vadd.f32 %v1180, %v1209
        %1219 = vset.pattern.permute.xlu0 0
        %1220 = vperm.xlu0 %1219, %v1033
        %v1221 = vpop.permute.xlu0 %1220
        %1224 = vset.pattern.permute.xlu0 0
        %1225 = vperm.xlu0 %1224, %v1034
        %v1226 = vpop.permute.xlu0 %1225
        %v1228 = vmul.f32 %v1221, %v1059
        %v1229 = vmul.f32 %v1221, %v1060
        %v1230 = vmul.f32 %v1226, %v1061
        %v1231 = vmul.f32 %v1226, %v1062
        %1233 = vset.pattern.permute.xlu0 0
        %1234 = vperm.xlu0 %1233, %v1039
        %v1235 = vpop.permute.xlu0 %1234
        %1238 = vset.pattern.permute.xlu0 0
        %1239 = vperm.xlu0 %1238, %v1040
        %v1240 = vpop.permute.xlu0 %1239
        %v1242 = vmul.f32 %v1235, %v1095
        %v1243 = vmul.f32 %v1235, %v1096
        %v1244 = vmul.f32 %v1240, %v1097
        %v1245 = vmul.f32 %v1240, %v1098
        %1250 = vrot.lane.b32.xlu0 %v1242, 112
        %v1251 = vpop.permute.xlu0 %1250
        %1252 = vrot.lane.b32.xlu0 %v1243, 112
        %v1253 = vpop.permute.xlu0 %1252
        %1254 = vrot.lane.b32.xlu0 %v1244, 112
        %v1255 = vpop.permute.xlu0 %1254
        %1256 = vrot.lane.b32.xlu0 %v1245, 112
        %v1257 = vpop.permute.xlu0 %1256
        %v1258 = vsel %vm1007, %v1251, %v1253
        %v1259 = vsel %vm1007, %v1255, %v1257
        %v1264 = vadd.f32 %v1228, %v1251
        %v1265 = vadd.f32 %v1229, %v1258
        %v1266 = vadd.f32 %v1230, %v1255
        %v1267 = vadd.f32 %v1231, %v1259
        %1269 = vset.pattern.permute.xlu0 0
        %1270 = vperm.xlu0 %1269, %v1045
        %v1271 = vpop.permute.xlu0 %1270
        %1274 = vset.pattern.permute.xlu0 0
        %1275 = vperm.xlu0 %1274, %v1046
        %v1276 = vpop.permute.xlu0 %1275
        %v1278 = vmul.f32 %v1271, %v1095
        %v1279 = vmul.f32 %v1271, %v1096
        %v1280 = vmul.f32 %v1276, %v1097
        %v1281 = vmul.f32 %v1276, %v1098
        %1286 = vrot.lane.b32.xlu0 %v1278, 96
        %v1287 = vpop.permute.xlu0 %1286
        %1288 = vrot.lane.b32.xlu0 %v1279, 96
        %v1289 = vpop.permute.xlu0 %1288
        %1290 = vrot.lane.b32.xlu0 %v1280, 96
        %v1291 = vpop.permute.xlu0 %1290
        %1292 = vrot.lane.b32.xlu0 %v1281, 96
        %v1293 = vpop.permute.xlu0 %1292
        %v1294 = vsel %vm1207, %v1287, %v1289
        %v1295 = vsel %vm1207, %v1291, %v1293
        %v1300 = vadd.f32 %v1264, %v1287
        %v1301 = vadd.f32 %v1265, %v1294
        %v1302 = vadd.f32 %v1266, %v1291
        %v1303 = vadd.f32 %v1267, %v1295
        %v1304 = vld [vmem:[%s6] sm:$0x1]
        %v1306 = vlaneseq
        %v1307 = vshrl.u32 %v1306, 7
        %v1308 = vsub.s32 0, %v1307
        %v1309 = vrot.slane %v1304, %v1308
        %1310 = vrot.lane.b32.xlu0 %v1309, 111
        %v1311 = vpop.permute.xlu0 %1310
        %v1313 = vmul.f32 %v1214, %v1311
        %v1314 = vmul.f32 %v1215, %v1311
        %v1315 = vmul.f32 %v1216, %v1311
        %v1316 = vmul.f32 %v1217, %v1311
        %1321 = vrot.lane.b32.xlu0 %v1313, 17
        %v1322 = vpop.permute.xlu0 %1321
        %1323 = vrot.lane.b32.xlu0 %v1314, 17
        %v1324 = vpop.permute.xlu0 %1323
        %1325 = vrot.lane.b32.xlu0 %v1315, 17
        %v1326 = vpop.permute.xlu0 %1325
        %1327 = vrot.lane.b32.xlu0 %v1316, 17
        %v1328 = vpop.permute.xlu0 %1327
        %vm1329 = vcmask 138240
        %v1330 = vsel %vm1329, %v1322, %v1324
        %v1331 = vsel %vm1329, %v1326, %v1328
        %v1334 = vadd.f32 %v1129, %v1330
        %v1335 = vadd.f32 %v1130, %v1331
        %v1336 = vld [vmem:[%s7] sm:$0x1]
        %v1338 = vlaneseq
        %v1339 = vshrl.u32 %v1338, 7
        %v1340 = vsub.s32 0, %v1339
        %v1341 = vrot.slane %v1336, %v1340
        %1342 = vrot.lane.b32.xlu0 %v1341, 113
        %v1343 = vpop.permute.xlu0 %1342
        %v1345 = vmul.f32 %v1300, %v1343
        %v1346 = vmul.f32 %v1301, %v1343
        %v1347 = vmul.f32 %v1302, %v1343
        %v1348 = vmul.f32 %v1303, %v1343
        %1353 = vrot.lane.b32.xlu0 %v1345, 15
        %v1354 = vpop.permute.xlu0 %1353
        %1355 = vrot.lane.b32.xlu0 %v1346, 15
        %v1356 = vpop.permute.xlu0 %1355
        %1357 = vrot.lane.b32.xlu0 %v1347, 15
        %v1358 = vpop.permute.xlu0 %1357
        %1359 = vrot.lane.b32.xlu0 %v1348, 15
        %v1360 = vpop.permute.xlu0 %1359
        %vm1361 = vcmask 121856
        %v1362 = vsel %vm1361, %v1354, %v1356
        %v1363 = vsel %vm1361, %v1358, %v1360
        %v1366 = vadd.f32 %v1334, %v1362
        %v1367 = vadd.f32 %v1335, %v1363
        %v1368 = vmul.f32 %v1366, 0.70710677
        %v1369 = vmul.f32 %v1367, 0.70710677
        %v1370 = vand.u32 2147483647, %v1368
        %v1371 = vand.u32 2147483647, %v1369
        %v1372 = vmul.f32 %v1370, 0.3275911
        %v1373 = vmul.f32 %v1371, 0.3275911
        %v1374 = vadd.f32 %v1372, 1.0
        %v1375 = vadd.f32 %v1373, 1.0
        %v1376 = vrcp.pop %v1374
        %v1377 = vrcp.pop %v1375
        %v1378 = vmul.f32 %v1376, 1.0614054
        %v1379 = vmul.f32 %v1377, 1.0614054
        %v1380 = vadd.f32 %v1378, -1.4531521
        %v1381 = vadd.f32 %v1379, -1.4531521
        %v1382 = vmul.f32 %v1376, %v1380
        %v1383 = vmul.f32 %v1377, %v1381
        %v1384 = vadd.f32 %v1382, 1.4214138
        %v1385 = vadd.f32 %v1383, 1.4214138
        %v1386 = vmul.f32 %v1376, %v1384
        %v1387 = vmul.f32 %v1377, %v1385
        %v1388 = vadd.f32 %v1386, -0.28449672
        %v1389 = vadd.f32 %v1387, -0.28449672
        %v1390 = vmul.f32 %v1376, %v1388
        %v1391 = vmul.f32 %v1377, %v1389
        %v1392 = vadd.f32 %v1390, 0.2548296
        %v1393 = vadd.f32 %v1391, 0.2548296
        %v1394 = vmul.f32 %v1376, %v1392
        %v1395 = vmul.f32 %v1377, %v1393
        %v1396 = vsub.f32 0.0, %v1370
        %v1397 = vsub.f32 0.0, %v1371
        %v1398 = vmul.f32 %v1396, %v1370
        %v1399 = vmul.f32 %v1397, %v1371
        %v1400 = vmul.f32 %v1398, 1.442695
        %v1401 = vpow.pop %v1400
        %v1402 = vmul.f32 %v1399, 1.442695
        %v1403 = vpow.pop %v1402
        %v1404 = vmul.f32 %v1394, %v1401
        %v1405 = vmul.f32 %v1395, %v1403
        %v1406 = vsub.f32 1.0, %v1404
        %v1407 = vsub.f32 1.0, %v1405
        %vm1408 = vcmp.lt.f32.partialorder %v1368, 0.0
        %vm1409 = vcmp.lt.f32.partialorder %v1369, 0.0
        %v1410 = vsub.f32 0.0, %v1406
        %v1411 = vsub.f32 0.0, %v1407
        %v1412 = vsel %vm1408, %v1410, %v1406
        %v1413 = vsel %vm1409, %v1411, %v1407
        %v1414 = vmul.f32 %v1366, 0.5
        %v1415 = vmul.f32 %v1367, 0.5
        %v1416 = vadd.f32 %v1412, 1.0
        %v1417 = vadd.f32 %v1413, 1.0
        %v1418 = vmul.f32 %v1414, %v1416
        %v1419 = vmul.f32 %v1415, %v1417
        %v1420 = vld [vmem:[%s5] sm:$0xff]
        %v1422 = vsel %vm1023, %v1420, 0
        %1424 = vmatprep.subr.mxu0 0.0
        %1425 = vmatpush1.msra.mxu0 0.0
        %1426 = vmatprep.subr.mxu0 0.0
        %1427 = vmatpush1.msra.mxu0 0.0
        %1428 = vmatprep.subr.mxu0 0.0
        %1429 = vmatpush1.msra.mxu0 0.0
        %1430 = vmatprep.subr.mxu0 0.0
        %1431 = vmatpush1.msra.mxu0 0.0
        %1432 = vmatprep.subr.mxu0 0.0
        %1433 = vmatpush1.msra.mxu0 0.0
        %1434 = vmatprep.subr.mxu0 0.0
        %1435 = vmatpush1.msra.mxu0 0.0
        %1436 = vmatprep.subr.mxu0 0.0
        %1437 = vmatpush1.msra.mxu0 0.0
        %1438 = vmatprep.subr.mxu0 0.0
        %1439 = vmatpush1.msra.mxu0 0.0
        %1440 = vmatprep.subr.mxu0 0.0
        %1441 = vmatpush1.msra.mxu0 0.0
        %1442 = vmatprep.subr.mxu0 0.0
        %1443 = vmatpush1.msra.mxu0 0.0
        %1444 = vmatprep.subr.mxu0 0.0
        %1445 = vmatpush1.msra.mxu0 0.0
        %1446 = vmatprep.subr.mxu0 0.0
        %1447 = vmatpush1.msra.mxu0 0.0
        %1448 = vmatprep.subr.mxu0 0.0
        %1449 = vmatpush1.msra.mxu0 0.0
        %1450 = vmatprep.subr.mxu0 0.0
        %1451 = vmatpush1.msra.mxu0 0.0
        %1452 = vmatprep.subr.mxu0 0.0
        %1453 = vmatpush1.msra.mxu0 %v1419
        %1454 = vmatprep.subr.mxu0 0.0
        %1455 = vmatpush1.msra.mxu0 %v1418
        %1456 = vmatprep.subr.mxu0 0.0
        %1457 = vmatpush2.msra.mxu0 0.0
        %1458 = vmatprep.subr.mxu0 0.0
        %1459 = vmatpush2.msra.mxu0 0.0
        %1460 = vmatprep.subr.mxu0 0.0
        %1461 = vmatpush2.msra.mxu0 0.0
        %1462 = vmatprep.subr.mxu0 0.0
        %1463 = vmatpush2.msra.mxu0 0.0
        %1464 = vmatprep.subr.mxu0 0.0
        %1465 = vmatpush2.msra.mxu0 0.0
        %1466 = vmatprep.subr.mxu0 0.0
        %1467 = vmatpush2.msra.mxu0 0.0
        %1468 = vmatprep.subr.mxu0 0.0
        %1469 = vmatpush2.msra.mxu0 0.0
        %1470 = vmatprep.subr.mxu0 0.0
        %1471 = vmatpush2.msra.mxu0 0.0
        %1472 = vmatprep.subr.mxu0 0.0
        %1473 = vmatpush2.msra.mxu0 0.0
        %1474 = vmatprep.subr.mxu0 0.0
        %1475 = vmatpush2.msra.mxu0 0.0
        %1476 = vmatprep.subr.mxu0 0.0
        %1477 = vmatpush2.msra.mxu0 0.0
        %1478 = vmatprep.subr.mxu0 0.0
        %1479 = vmatpush2.msra.mxu0 0.0
        %1480 = vmatprep.subr.mxu0 0.0
        %1481 = vmatpush2.msra.mxu0 0.0
        %1482 = vmatprep.subr.mxu0 0.0
        %1483 = vmatpush2.msra.mxu0 0.0
        %1484 = vmatprep.subr.mxu0 0.0
        %1485 = vmatpush2.msra.mxu0 0.0
        %1486 = vmatprep.subr.mxu0 0.0
        %1487 = vmatpush2.msra.mxu0 0.0
        %1488 = vmatprep.mubr.f32.mxu0 0.0
        %1489 = vmatmul.mubr.f32.gmra.mxu0 %v1422
        %v1490 = vpop.f32.mrf.mxu0
        %v1491 = vadd.f32 0.0, %v1490
        %v1492 = vpop.f32.mrf.mxu0
        %1493 = vdwg.mxu0
        %1494 = vst [vmem:[%s534] sm:$0xff] %v1491
        %p1495 = scmp.lt.s32.totalorder %s23, 1
        %s1496 = scalar_select %p1495, %s23, 1
        %p1497 = scmp.lt.s32.totalorder %s24, 1
        %s1498 = scalar_select %p1497, %s24, 1
        %s1499 = smul.addr %s1496, 2
        %s1500 = sadd.s32 %s1498, %s1499
        %s1501 = smul.addr %s1500, 8
        %s1502 = scalar_lea.vmem %s8, %s1501
        // Predicated region
        $region129: #{norm_mlp_forward.3} parent=119 // pred_check
          %p1503 = pneg %p252
        $region130: #{norm_mlp_forward.3} parent=119 // pred_check_branch
          %1505 = sbr.rel (%p1503) target = $region132
        $region131: #{norm_mlp_forward.3} parent=119 // pred_region
          _
        $region132: #{norm_mlp_forward.3} parent=119 // pred_fallthru
          _
      $region120: #{norm_mlp_forward.3} parent=5 // pred_fallthru
        _
      %p1506 = scmp.le.s32.totalorder 2, %s14
      // Predicated region
      $region133: #{norm_mlp_forward.3} parent=5 // pred_check
        %p1507 = pneg %p1506
      $region134: #{norm_mlp_forward.3} parent=5 // pred_check_branch
        %1509 = sbr.rel (%p1507) target = $region136
      $region135: #{norm_mlp_forward.3} parent=5 // pred_region
        %s1510 = ssub.s32 %s14, 2
        // Predicated region
        $region137: #{norm_mlp_forward.3} parent=135 // pred_check
          %p1511 = pneg %p258
        $region138: #{norm_mlp_forward.3} parent=135 // pred_check_branch
          %1513 = sbr.rel (%p1511) target = $region140
        $region139: #{norm_mlp_forward.3} parent=135 // pred_region
          %p1514 = scmp.lt.s32.totalorder %s25, 1
          %s1515 = scalar_select %p1514, %s25, 1
          %p1516 = scmp.lt.s32.totalorder %s26, 1
          %s1517 = scalar_select %p1516, %s26, 1
          %s1518 = smul.addr %s1515, 2
          %s1519 = sadd.s32 %s1517, %s1518
          %s1520 = smul.addr %s1519, 8
          %s1521 = scalar_lea.vmem %s8, %s1520
        $region140: #{norm_mlp_forward.3} parent=135 // pred_fallthru
          _
      $region136: #{norm_mlp_forward.3} parent=5 // pred_fallthru
        _
    $region6: #{norm_mlp_forward.3} parent=1 // loop_footer
      %s18 = sadd.s32 1, %s14
    $region7: #{norm_mlp_forward.3} parent=1 // loop_footer_branch
      %13 = sbr.rel target = $region3
    $region8: #{norm_mlp_forward.3} parent=1 // loop_exit
      _

</llo_original>
